<compile_context>
chip_gen: v6e
topology: v6e:2x2x1
jax: 0.10.0
libtpu: 0.0.40
codegen_flags: <defaults>
</compile_context>

<pallas_src>
import functools
import math

import jax
import jax.numpy as jnp
from jax import lax
from jax.experimental import pallas as pl
from jax.experimental.pallas import tpu as pltpu

EXPANSION = 4
BN_EPS = 1e-5


# --------------------------------- kernel ---------------------------------

def _bottleneck_kernel(x_ref, s1_ref, b1_ref, w1_ref, b2_ref, w2_ref,
                       b3_ref, w3x_ref, out_ref, pad_ref, slab_ref,
                       *deint_refs, stride, has_shortcut):
    _, H, W, Cin = x_ref.shape
    P = w1_ref.shape[1]
    _, Tho, Wo, Cout = out_ref.shape
    s = stride
    Hmid = (Tho - 1) * s + 1          # input rows feeding this band's centers
    Hb = Hmid + 2                     # + top/bottom halo rows
    bf16 = jnp.bfloat16
    f32 = jnp.float32

    r = pl.program_id(1)              # row-band index
    g_mid = r * (Tho * s)             # first input row of the band's middle

    # Hoist the small per-channel params (used 3-4 times below).
    s1 = s1_ref[...]
    b1 = b1_ref[...]
    w1 = w1_ref[...]
    b2 = b2_ref[...]

    def bn1_conv1(x_rows):
        # x_rows: (1, rows, W, Cin) bf16 -> BN1 (f32) -> ReLU -> conv1 (bf16
        # MXU, BN2 scale folded into w1) -> +b2 -> ReLU -> bf16 (rows, W, P).
        rows = x_rows.shape[1]
        pre = jnp.maximum(
            x_rows.astype(f32).reshape(rows * W, Cin) * s1 + b1, 0.0)
        o1 = jnp.dot(pre.astype(bf16), w1, preferred_element_type=f32)
        a2 = jnp.maximum(o1 + b2, 0.0)
        return a2.astype(bf16).reshape(rows, W, P)

    # ---- BN1 + conv1 (+ folded BN2 scale) on the band's middle rows.
    a2_mid = bn1_conv1(x_ref[:, pl.ds(g_mid, Hmid), :, :])
    pad_ref[1:Hmid + 1, 1:W + 1, :] = a2_mid

    # ---- top/bottom halo rows: computed unconditionally from a clamped row
    # index and masked to zero when they fall outside the image (this realises
    # the 3x3 conv's zero padding in H without pl.when branches).
    top_g = g_mid - 1
    a2_top = bn1_conv1(x_ref[:, pl.ds(jnp.maximum(top_g, 0), 1), :, :])
    pad_ref[0:1, 1:W + 1, :] = a2_top * (top_g >= 0).astype(bf16)

    bot_g = g_mid + Hmid
    a2_bot = bn1_conv1(x_ref[:, pl.ds(jnp.minimum(bot_g, H - 1), 1), :, :])
    pad_ref[Hmid + 1:Hmid + 2, 1:W + 1, :] = a2_bot * (bot_g < H).astype(bf16)

    # ---- zero padding in W (thin columns; re-written every step on purpose,
    # see NOTE at top of file).
    pad_ref[:, 0:1, :] = jnp.zeros((Hb, 1, P), bf16)
    pad_ref[:, W + 1:W + 2, :] = jnp.zeros((Hb, 1, P), bf16)

    # ---- conv2: 3x3 stride s as ONE im2col matmul (K = 9P).  Taps are stored
    # straight into the persistent slab scratch.
    if s == 1:
        for dy in range(3):
            for dx in range(3):
                win = pad_ref[dy:dy + Tho, dx:dx + Wo, :]
                k0 = (dy * 3 + dx) * P
                slab_ref[:, k0:k0 + P] = win.reshape(Tho * Wo, P)
    else:  # s == 2: deinterleave padded columns once (2 strided reads, not 9)
        even_ref, odd_ref = deint_refs
        even_ref[...] = pad_ref[:, pl.ds(0, Wo + 1, s), :]   # cols 0,2,...,2Wo
        odd_ref[...] = pad_ref[:, pl.ds(1, Wo, s), :]        # cols 1,3,...,2Wo-1
        for dy in range(3):
            for dx in range(3):
                if dx == 0:
                    win = even_ref[pl.ds(dy, Tho, s), 0:Wo, :]
                elif dx == 1:
                    win = odd_ref[pl.ds(dy, Tho, s), 0:Wo, :]
                else:
                    win = even_ref[pl.ds(dy, Tho, s), 1:Wo + 1, :]
                k0 = (dy * 3 + dx) * P
                slab_ref[:, k0:k0 + P] = win.reshape(Tho * Wo, P)

    acc = jnp.dot(slab_ref[...], w2_ref[...], preferred_element_type=f32)
    a3 = jnp.maximum(acc + b3_ref[...], 0.0).astype(bf16)    # (Tho*Wo, P)

    # ---- conv3 (+ projection shortcut) fused into one MXU matmul.
    if has_shortcut:
        if s == 1:
            x_sc = x_ref[:, pl.ds(g_mid, Tho), :, :]
        else:
            x_sc = x_ref[:, pl.ds(g_mid, Tho, s), pl.ds(0, Wo, s), :]
        pre_sc = jnp.maximum(
            x_sc.astype(f32).reshape(Tho * Wo, Cin) * s1 + b1, 0.0).astype(bf16)
        kin = jnp.concatenate([a3, pre_sc], axis=-1)         # (Tho*Wo, P+Cin)
        out = jnp.dot(kin, w3x_ref[...], preferred_element_type=f32)
    else:
        out = jnp.dot(a3, w3x_ref[...], preferred_element_type=f32)
        # identity shortcut (s == 1, Cin == Cout): re-read x late so the big
        # input upcast has a short live range.
        out = out + x_ref[:, pl.ds(g_mid, Tho), :, :].astype(f32).reshape(
            Tho * Wo, Cin)

    out_ref[...] = out.reshape(1, Tho, Wo, Cout).astype(out_ref.dtype)


# --------------------------------- wrapper ---------------------------------

def _nbytes(a):
    return math.prod(a.shape) * jnp.dtype(a.dtype).itemsize


def _resident_spec(shape):
    zeros = (0,) * len(shape)
    return pl.BlockSpec(shape, lambda n, r: zeros)


def _vmem_cap_bytes():
    """Per-core VMEM minus ~25% headroom for compiler-internal scratch."""
    cap = 64 * 1024 * 1024            # conservative default (v7x per-TC VMEM)
    try:
        info = pltpu.get_tpu_info()
        cap = int(getattr(info, "vmem_capacity_bytes", cap))
    except Exception:
        pass
    return (cap * 3) // 4             # ~48 MiB on v7x, ~96 MiB on v5e/v6e


def _band_vmem_bytes(Tho, H, W, Wo, Cin, P, Cout, s, param_bytes):
    """Conservative per-band working set: blocks + scratch + temporaries."""
    Hmid = (Tho - 1) * s + 1
    Hb = Hmid + 2
    bf, f4 = 2, 4
    total = 0
    total += 2 * H * W * Cin * bf            # double-buffered full-image input
    total += 2 * Tho * Wo * Cout * bf        # double-buffered output block
    total += 2 * param_bytes                 # resident weights / BN affines
    total += Hb * (W + 2) * P * bf           # padded a2 scratch
    total += Tho * Wo * 9 * P * bf           # im2col slab scratch
    if s > 1:
        total += 2 * Hb * (Wo + 1) * P * bf  # even/odd deinterleave scratch
    total += Hmid * W * Cin * (f4 + bf)      # pre (f32) + pre (bf16)
    total += Hmid * W * P * (f4 + bf)        # conv1 acc + a2 cast
    total += Tho * Wo * P * (2 * f4 + bf)    # conv2 acc, a3 f32, a3 bf16
    total += Tho * Wo * (P + Cin) * bf       # fused conv3/shortcut K slab
    total += Tho * Wo * Cout * f4            # conv3/shortcut accumulator
    return total


def _pick_row_bands(Ho, H, W, Wo, Cin, P, Cout, s, param_bytes, budget):
    """Smallest number of row bands (>=2 when possible, for v7x's 2 TCs) whose
    per-band working set fits the VMEM budget."""
    want = 2 if Ho >= 2 else 1
    for r in range(want, Ho + 1):
        if Ho % r:
            continue
        if _band_vmem_bytes(Ho // r, H, W, Wo, Cin, P, Cout, s,
                            param_bytes) <= budget:
            return r
    return Ho


def preact_bottleneck_nhwc(x_nhwc, kparams, stride, out_dtype=jnp.bfloat16):
    N, H, W, Cin = x_nhwc.shape
    P = kparams["w1"].shape[1]
    Cout = kparams["w3"].shape[1]
    s = stride
    assert s in (1, 2), "ResNet bottleneck stride must be 1 or 2"
    Ho = (H - 1) // s + 1
    Wo = (W - 1) // s + 1
    has_shortcut = (s != 1) or (Cin != Cout)
    if not has_shortcut:
        assert s == 1 and Cin == Cout

    # bf16 activation I/O (math stays f32-accumulated inside the kernel).
    x = x_nhwc.astype(jnp.bfloat16)
    if has_shortcut:
        # Stack conv3 and shortcut weights so the kernel does one fused matmul.
        w3x = jnp.concatenate([kparams["w3"], kparams["wsc"]], axis=0)
    else:
        w3x = kparams["w3"]

    args = (x, kparams["s1"], kparams["b1"], kparams["w1"], kparams["b2"],
            kparams["w2"], kparams["b3"], w3x)
    param_bytes = sum(_nbytes(a) for a in args[1:])

    vmem_limit = _vmem_cap_bytes()
    R = _pick_row_bands(Ho, H, W, Wo, Cin, P, Cout, s, param_bytes, vmem_limit)
    Tho = Ho // R
    Hmid = (Tho - 1) * s + 1
    Hb = Hmid + 2

    in_specs = [pl.BlockSpec((1, H, W, Cin), lambda n, r: (n, 0, 0, 0))]
    in_specs += [_resident_spec(a.shape) for a in args[1:]]
    out_specs = pl.BlockSpec((1, Tho, Wo, Cout), lambda n, r: (n, r, 0, 0))

    scratch = [pltpu.VMEM((Hb, W + 2, P), jnp.bfloat16),        # padded a2
               pltpu.VMEM((Tho * Wo, 9 * P), jnp.bfloat16)]     # im2col slab
    if s > 1:
        scratch += [pltpu.VMEM((Hb, Wo + 1, P), jnp.bfloat16),  # even cols
                    pltpu.VMEM((Hb, Wo, P), jnp.bfloat16)]      # odd cols

    kernel = functools.partial(_bottleneck_kernel, stride=s,
                               has_shortcut=has_shortcut)

    flops = 2 * N * (H * W * Cin * P
                     + Ho * Wo * 9 * P * P
                     + Ho * Wo * P * Cout
                     + (Ho * Wo * Cin * Cout if has_shortcut else 0))
    bytes_accessed = (N * H * W * Cin * 2          # bf16 input
                      + N * Ho * Wo * Cout * 2     # bf16 output
                      + param_bytes)

    return pl.pallas_call(
        kernel,
        out_shape=jax.ShapeDtypeStruct((N, Ho, Wo, Cout), out_dtype),
        grid=(N, R),
        in_specs=in_specs,
        out_specs=out_specs,
        scratch_shapes=scratch,
        compiler_params=pltpu.CompilerParams(
            dimension_semantics=("parallel", "parallel"),
            vmem_limit_bytes=int(vmem_limit)),
        cost_estimate=pl.CostEstimate(flops=flops, transcendentals=0,
                                      bytes_accessed=bytes_accessed),
    )(*args)


def preact_bottleneck(x_nchw, kparams, stride):
    """Forward pass matching the PyTorch module (inference-mode BN), NCHW API."""
    # TODO(synk): in a full ResNet keep activations NHWC/bf16 end-to-end and
    # hoist these boundary transposes to the first/last layer.
    x = jnp.transpose(x_nchw, (0, 2, 3, 1))
    out = preact_bottleneck_nhwc(x, kparams, stride)
    return jnp.transpose(out, (0, 3, 1, 2))


# ----------------------- parameter setup (plain JAX glue) -----------------------

def init_raw_params(key, in_planes, planes):
    cout = EXPANSION * planes
    ks = jax.random.split(key, 8)

    def bn_params(k, c):
        k1, k2, k3, k4 = jax.random.split(k, 4)
        gamma = 1.0 + 0.1 * jax.random.normal(k1, (c,), jnp.float32)
        beta = 0.1 * jax.random.normal(k2, (c,), jnp.float32)
        mean = 0.1 * jax.random.normal(k3, (c,), jnp.float32)
        var = jnp.abs(1.0 + 0.1 * jax.random.normal(k4, (c,), jnp.float32))
        return (gamma, beta, mean, var)

    return {
        "bn1": bn_params(ks[0], in_planes),
        "bn2": bn_params(ks[1], planes),
        "bn3": bn_params(ks[2], planes),
        # PyTorch conv weights: (out, in, kh, kw)
        "w1": jax.random.normal(ks[3], (planes, in_planes, 1, 1), jnp.float32)
              / jnp.sqrt(float(in_planes)),
        "w2": jax.random.normal(ks[4], (planes, planes, 3, 3), jnp.float32)
              / jnp.sqrt(9.0 * planes),
        "w3": jax.random.normal(ks[5], (cout, planes, 1, 1), jnp.float32)
              / jnp.sqrt(float(planes)),
        "wsc": jax.random.normal(ks[6], (cout, in_planes, 1, 1), jnp.float32)
               / jnp.sqrt(float(in_planes)),
    }


def fold_bn(gamma, beta, mean, var, eps=BN_EPS):
    scale = gamma / jnp.sqrt(var + eps)
    bias = beta - mean * scale
    return scale.reshape(1, -1), bias.reshape(1, -1)


def to_kernel_params(raw):
    """Fold BN into affines; fold BN2/BN3 *scales* into w1/w2; bf16 weights."""
    s1, b1 = fold_bn(*raw["bn1"])
    s2, b2 = fold_bn(*raw["bn2"])
    s3, b3 = fold_bn(*raw["bn3"])
    P = raw["w1"].shape[0]
    w1 = raw["w1"][:, :, 0, 0].T * s2                        # (Cin, P), s2 folded
    w2 = jnp.transpose(raw["w2"], (2, 3, 1, 0))              # HWIO (3, 3, P, P)
    w2 = (w2 * s3.reshape(1, 1, 1, P)).reshape(9 * P, P)     # s3 folded, im2col K
    w3 = raw["w3"][:, :, 0, 0].T                             # (P, 4P)
    wsc = raw["wsc"][:, :, 0, 0].T                           # (Cin, 4P)
    return {"s1": s1, "b1": b1,
            "w1": w1.astype(jnp.bfloat16), "b2": b2,
            "w2": w2.astype(jnp.bfloat16), "b3": b3,
            "w3": w3.astype(jnp.bfloat16),
            "wsc": wsc.astype(jnp.bfloat16)}


# ----------------------------- references (JAX) ------------------------------

def reference(x, raw, stride, in_planes, planes):
    """Exact f32 PyTorch-semantics reference (lax.conv, NCHW)."""
    cout = EXPANSION * planes

    def bn(v, p):
        g, b, m, vv = p
        inv = g / jnp.sqrt(vv + BN_EPS)
        return (v - m[None, :, None, None]) * inv[None, :, None, None] \
            + b[None, :, None, None]

    def conv(v, w, s=1, pad=0):
        return lax.conv_general_dilated(
            v, w, (s, s), [(pad, pad), (pad, pad)],
            dimension_numbers=("NCHW", "OIHW", "NCHW"),
            precision=lax.Precision.HIGHEST)

    pre = jax.nn.relu(bn(x, raw["bn1"]))
    has_sc = (stride != 1) or (in_planes != cout)
    sc = conv(pre, raw["wsc"], stride) if has_sc else x
    o = conv(pre, raw["w1"])
    o = conv(jax.nn.relu(bn(o, raw["bn2"])), raw["w2"], stride, 1)
    o = conv(jax.nn.relu(bn(o, raw["bn3"])), raw["w3"])
    return o + sc


def reference_folded(x_bf16_nhwc, kp, stride, has_shortcut):
    """Mirrors the kernel math (bf16 I/O, folded params, bf16 matmuls)."""
    N, H, W, Cin = x_bf16_nhwc.shape
    P = kp["w1"].shape[1]
    s = stride
    Ho = (H - 1) // s + 1
    Wo = (W - 1) // s + 1
    bf16 = jnp.bfloat16

    xf = x_bf16_nhwc.astype(jnp.float32)
    pre = jnp.maximum(xf * kp["s1"].reshape(1, 1, 1, Cin)
                      + kp["b1"].reshape(1, 1, 1, Cin), 0.0)
    o1 = jnp.einsum("nhwc,cp->nhwp", pre.astype(bf16), kp["w1"],
                    preferred_element_type=jnp.float32)
    a2 = jnp.maximum(o1 + kp["b2"].reshape(1, 1, 1, P), 0.0).astype(bf16)
    pad = jnp.pad(a2, ((0, 0), (1, 1), (1, 1), (0, 0)))
    taps = []
    for dy in range(3):
        for dx in range(3):
            taps.append(pad[:, dy:dy + s * (Ho - 1) + 1:s,
                            dx:dx + s * (Wo - 1) + 1:s, :])
    slab = jnp.concatenate(taps, axis=-1)                    # (N, Ho, Wo, 9P)
    acc = jnp.einsum("nhwk,kp->nhwp", slab, kp["w2"],
                     preferred_element_type=jnp.float32)
    a3 = jnp.maximum(acc + kp["b3"].reshape(1, 1, 1, P), 0.0).astype(bf16)
    o3 = jnp.einsum("nhwp,pc->nhwc", a3, kp["w3"],
                    preferred_element_type=jnp.float32)
    if has_shortcut:
        pre_sc = pre[:, ::s, ::s, :].astype(bf16)
        sc = jnp.einsum("nhwc,ck->nhwk", pre_sc, kp["wsc"],
                        preferred_element_type=jnp.float32)
    else:
        sc = xf
    return (o3 + sc).astype(bf16)


# ----------------------------------- test -----------------------------------

if __name__ == "__main__":
    key = jax.random.PRNGKey(0)
    N, H, W = 2, 8, 8
    configs = [
        (16, 8, 1),   # channel mismatch -> shortcut conv, stride 1
        (32, 8, 2),   # strided shortcut conv (downsampling)
        (32, 8, 1),   # identity shortcut
    ]
    for in_planes, planes, stride in configs:
        key, kx, kp = jax.random.split(key, 3)
        x = jax.random.normal(kx, (N, in_planes, H, W), jnp.float32)
        raw = init_raw_params(kp, in_planes, planes)
        kparams = to_kernel_params(raw)

        out = preact_bottleneck(x, kparams, stride)
        out = jax.block_until_ready(out)
        out_f32 = out.astype(jnp.float32)

        # Exact f32 reference (tolerance accounts for bf16 I/O + bf16 matmuls).
        ref = reference(x, raw, stride, in_planes, planes)
        assert out.shape == ref.shape, (out.shape, ref.shape)
        err_f32 = float(jnp.max(jnp.abs(out_f32 - ref)))
        assert jnp.allclose(out_f32, ref, atol=2.5e-1, rtol=1e-1), err_f32

        # bf16-path mirror of the kernel math (tighter tolerance).
        x_bf = jnp.transpose(x, (0, 2, 3, 1)).astype(jnp.bfloat16)
        has_sc = (stride != 1) or (in_planes != EXPANSION * planes)
        mir = reference_folded(x_bf, kparams, stride, has_sc)
        mir = jnp.transpose(mir, (0, 3, 1, 2)).astype(jnp.float32)
        err_mir = float(jnp.max(jnp.abs(out_f32 - mir)))
        assert err_mir < 1.5e-1, err_mir

    print("KERNEL_OK")
</pallas_src>

<mosaic_0001>
module attributes {stable_mosaic.version = 11 : i64} {
  func.func @_bottleneck_kernel(%arg0: i32, %arg1: i32, %arg2: memref<1x8x8x16xbf16, #tpu.memory_space<vmem>>, %arg3: memref<1x16xf32, #tpu.memory_space<vmem>>, %arg4: memref<1x16xf32, #tpu.memory_space<vmem>>, %arg5: memref<16x8xbf16, #tpu.memory_space<vmem>>, %arg6: memref<1x8xf32, #tpu.memory_space<vmem>>, %arg7: memref<72x8xbf16, #tpu.memory_space<vmem>>, %arg8: memref<1x8xf32, #tpu.memory_space<vmem>>, %arg9: memref<24x32xbf16, #tpu.memory_space<vmem>>, %arg10: memref<1x4x8x32xbf16, #tpu.memory_space<vmem>>, %arg11: memref<6x10x8xbf16, #tpu.memory_space<vmem>>, %arg12: memref<32x72xbf16, #tpu.memory_space<vmem>>) attributes {dimension_semantics = [#tpu.dimension_semantics<parallel>, #tpu.dimension_semantics<parallel>], iteration_bounds = array<i64: 2, 2>, scalar_prefetch = 0 : i64, scratch_operands = 2 : i64, tpu.core_type = #tpu.core_type<tc>, window_params = [{transform_indices = @transform_0, window_bounds = array<i64: 1, 8, 8, 16>}, {pipeline_mode = #tpu.pipeline_mode<synchronous>, transform_indices = @transform_1, window_bounds = array<i64: 1, 16>}, {pipeline_mode = #tpu.pipeline_mode<synchronous>, transform_indices = @transform_2, window_bounds = array<i64: 1, 16>}, {pipeline_mode = #tpu.pipeline_mode<synchronous>, transform_indices = @transform_3, window_bounds = array<i64: 16, 8>}, {pipeline_mode = #tpu.pipeline_mode<synchronous>, transform_indices = @transform_4, window_bounds = array<i64: 1, 8>}, {pipeline_mode = #tpu.pipeline_mode<synchronous>, transform_indices = @transform_5, window_bounds = array<i64: 72, 8>}, {pipeline_mode = #tpu.pipeline_mode<synchronous>, transform_indices = @transform_6, window_bounds = array<i64: 1, 8>}, {pipeline_mode = #tpu.pipeline_mode<synchronous>, transform_indices = @transform_7, window_bounds = array<i64: 24, 32>}, {transform_indices = @transform_8, window_bounds = array<i64: 1, 4, 8, 32>}]} {
    %c4_i32 = arith.constant 4 : i32
    %0 = arith.muli %arg1, %c4_i32 : i32
    %c0 = arith.constant 0 : index
    %c0_0 = arith.constant 0 : index
    %1 = vector.load %arg3[%c0, %c0_0] : memref<1x16xf32, #tpu.memory_space<vmem>>, vector<1x16xf32>
    %c0_1 = arith.constant 0 : index
    %c0_2 = arith.constant 0 : index
    %2 = vector.load %arg4[%c0_1, %c0_2] : memref<1x16xf32, #tpu.memory_space<vmem>>, vector<1x16xf32>
    %c0_3 = arith.constant 0 : index
    %c0_4 = arith.constant 0 : index
    %3 = vector.load %arg5[%c0_3, %c0_4] : memref<16x8xbf16, #tpu.memory_space<vmem>>, vector<16x8xbf16>
    %c0_5 = arith.constant 0 : index
    %c0_6 = arith.constant 0 : index
    %4 = vector.load %arg6[%c0_5, %c0_6] : memref<1x8xf32, #tpu.memory_space<vmem>>, vector<1x8xf32>
    %c0_7 = arith.constant 0 : index
    %5 = arith.index_cast %0 : i32 to index
    %c0_8 = arith.constant 0 : index
    %c0_9 = arith.constant 0 : index
    %6 = vector.load %arg2[%c0_7, %5, %c0_8, %c0_9] : memref<1x8x8x16xbf16, #tpu.memory_space<vmem>>, vector<1x4x8x16xbf16>
    %7 = arith.extf %6 : vector<1x4x8x16xbf16> to vector<1x4x8x16xf32>
    %8 = vector.shape_cast %7 : vector<1x4x8x16xf32> to vector<32x16xf32>
    %9 = vector.broadcast %1 : vector<1x16xf32> to vector<32x16xf32>
    %10 = arith.mulf %8, %9 : vector<32x16xf32>
    %11 = vector.broadcast %2 : vector<1x16xf32> to vector<32x16xf32>
    %12 = arith.addf %10, %11 : vector<32x16xf32>
    %cst = arith.constant 0.000000e+00 : f32
    %13 = vector.broadcast %cst : f32 to vector<32x16xf32>
    %14 = arith.maximumf %12, %13 : vector<32x16xf32>
    %15 = arith.truncf %14 : vector<32x16xf32> to vector<32x16xbf16>
    %cst_10 = arith.constant dense<0.000000e+00> : vector<32x8xf32>
    %16 = tpu.matmul %15, %3, %cst_10 {dimension_numbers = #tpu.dot_dimension_numbers<[1], [0], [0], [1], [0, 0, 1, 1], [], []>} : vector<32x16xbf16>, vector<16x8xbf16>, vector<32x8xf32> -> vector<32x8xf32>
    %17 = vector.broadcast %4 : vector<1x8xf32> to vector<32x8xf32>
    %18 = arith.addf %16, %17 : vector<32x8xf32>
    %cst_11 = arith.constant 0.000000e+00 : f32
    %19 = vector.broadcast %cst_11 : f32 to vector<32x8xf32>
    %20 = arith.maximumf %18, %19 : vector<32x8xf32>
    %21 = arith.truncf %20 : vector<32x8xf32> to vector<32x8xbf16>
    %22 = vector.shape_cast %21 : vector<32x8xbf16> to vector<4x8x8xbf16>
    %c1 = arith.constant 1 : index
    %c1_12 = arith.constant 1 : index
    %c0_13 = arith.constant 0 : index
    %23 = vector.load %arg11[%c1, %c1_12, %c0_13] : memref<6x10x8xbf16, #tpu.memory_space<vmem>>, vector<4x8x8xbf16>
    tpu.vector_store %arg11[%c1, %c1_12, %c0_13], %22 {strides = array<i32>} : memref<6x10x8xbf16, #tpu.memory_space<vmem>>, vector<4x8x8xbf16>,
    %c1_i32 = arith.constant 1 : i32
    %24 = arith.subi %0, %c1_i32 : i32
    %c0_i32 = arith.constant 0 : i32
    %25 = arith.maxsi %24, %c0_i32 : i32
    %c0_14 = arith.constant 0 : index
    %26 = arith.index_cast %25 : i32 to index
    %c0_15 = arith.constant 0 : index
    %c0_16 = arith.constant 0 : index
    %27 = vector.load %arg2[%c0_14, %26, %c0_15, %c0_16] : memref<1x8x8x16xbf16, #tpu.memory_space<vmem>>, vector<1x1x8x16xbf16>
    %28 = arith.extf %27 : vector<1x1x8x16xbf16> to vector<1x1x8x16xf32>
    %29 = vector.shape_cast %28 : vector<1x1x8x16xf32> to vector<8x16xf32>
    %30 = vector.broadcast %1 : vector<1x16xf32> to vector<8x16xf32>
    %31 = arith.mulf %29, %30 : vector<8x16xf32>
    %32 = vector.broadcast %2 : vector<1x16xf32> to vector<8x16xf32>
    %33 = arith.addf %31, %32 : vector<8x16xf32>
    %cst_17 = arith.constant 0.000000e+00 : f32
    %34 = vector.broadcast %cst_17 : f32 to vector<8x16xf32>
    %35 = arith.maximumf %33, %34 : vector<8x16xf32>
    %36 = arith.truncf %35 : vector<8x16xf32> to vector<8x16xbf16>
    %cst_18 = arith.constant dense<0.000000e+00> : vector<8x8xf32>
    %37 = tpu.matmul %36, %3, %cst_18 {dimension_numbers = #tpu.dot_dimension_numbers<[1], [0], [0], [1], [0, 0, 1, 1], [], []>} : vector<8x16xbf16>, vector<16x8xbf16>, vector<8x8xf32> -> vector<8x8xf32>
    %38 = vector.broadcast %4 : vector<1x8xf32> to vector<8x8xf32>
    %39 = arith.addf %37, %38 : vector<8x8xf32>
    %cst_19 = arith.constant 0.000000e+00 : f32
    %40 = vector.broadcast %cst_19 : f32 to vector<8x8xf32>
    %41 = arith.maximumf %39, %40 : vector<8x8xf32>
    %42 = arith.truncf %41 : vector<8x8xf32> to vector<8x8xbf16>
    %43 = vector.shape_cast %42 : vector<8x8xbf16> to vector<1x8x8xbf16>
    %c0_i32_20 = arith.constant 0 : i32
    %44 = arith.cmpi sge, %24, %c0_i32_20 : i32
    %45 = arith.extui %44 : i1 to i32
    %46 = arith.sitofp %45 : i32 to f32
    %47 = arith.truncf %46 : f32 to bf16
    %48 = vector.broadcast %47 : bf16 to vector<1x8x8xbf16>
    %49 = arith.mulf %43, %48 : vector<1x8x8xbf16>
    %c0_21 = arith.constant 0 : index
    %c1_22 = arith.constant 1 : index
    %c0_23 = arith.constant 0 : index
    %50 = vector.load %arg11[%c0_21, %c1_22, %c0_23] : memref<6x10x8xbf16, #tpu.memory_space<vmem>>, vector<1x8x8xbf16>
    tpu.vector_store %arg11[%c0_21, %c1_22, %c0_23], %49 {strides = array<i32>} : memref<6x10x8xbf16, #tpu.memory_space<vmem>>, vector<1x8x8xbf16>,
    %c4_i32_24 = arith.constant 4 : i32
    %51 = arith.addi %0, %c4_i32_24 : i32
    %c7_i32 = arith.constant 7 : i32
    %52 = arith.minsi %51, %c7_i32 : i32
    %c0_25 = arith.constant 0 : index
    %53 = arith.index_cast %52 : i32 to index
    %c0_26 = arith.constant 0 : index
    %c0_27 = arith.constant 0 : index
    %54 = vector.load %arg2[%c0_25, %53, %c0_26, %c0_27] : memref<1x8x8x16xbf16, #tpu.memory_space<vmem>>, vector<1x1x8x16xbf16>
    %55 = arith.extf %54 : vector<1x1x8x16xbf16> to vector<1x1x8x16xf32>
    %56 = vector.shape_cast %55 : vector<1x1x8x16xf32> to vector<8x16xf32>
    %57 = vector.broadcast %1 : vector<1x16xf32> to vector<8x16xf32>
    %58 = arith.mulf %56, %57 : vector<8x16xf32>
    %59 = vector.broadcast %2 : vector<1x16xf32> to vector<8x16xf32>
    %60 = arith.addf %58, %59 : vector<8x16xf32>
    %cst_28 = arith.constant 0.000000e+00 : f32
    %61 = vector.broadcast %cst_28 : f32 to vector<8x16xf32>
    %62 = arith.maximumf %60, %61 : vector<8x16xf32>
    %63 = arith.truncf %62 : vector<8x16xf32> to vector<8x16xbf16>
    %cst_29 = arith.constant dense<0.000000e+00> : vector<8x8xf32>
    %64 = tpu.matmul %63, %3, %cst_29 {dimension_numbers = #tpu.dot_dimension_numbers<[1], [0], [0], [1], [0, 0, 1, 1], [], []>} : vector<8x16xbf16>, vector<16x8xbf16>, vector<8x8xf32> -> vector<8x8xf32>
    %65 = vector.broadcast %4 : vector<1x8xf32> to vector<8x8xf32>
    %66 = arith.addf %64, %65 : vector<8x8xf32>
    %cst_30 = arith.constant 0.000000e+00 : f32
    %67 = vector.broadcast %cst_30 : f32 to vector<8x8xf32>
    %68 = arith.maximumf %66, %67 : vector<8x8xf32>
    %69 = arith.truncf %68 : vector<8x8xf32> to vector<8x8xbf16>
    %70 = vector.shape_cast %69 : vector<8x8xbf16> to vector<1x8x8xbf16>
    %c8_i32 = arith.constant 8 : i32
    %71 = arith.cmpi slt, %51, %c8_i32 : i32
    %72 = arith.extui %71 : i1 to i32
    %73 = arith.sitofp %72 : i32 to f32
    %74 = arith.truncf %73 : f32 to bf16
    %75 = vector.broadcast %74 : bf16 to vector<1x8x8xbf16>
    %76 = arith.mulf %70, %75 : vector<1x8x8xbf16>
    %c5 = arith.constant 5 : index
    %c1_31 = arith.constant 1 : index
    %c0_32 = arith.constant 0 : index
    %77 = vector.load %arg11[%c5, %c1_31, %c0_32] : memref<6x10x8xbf16, #tpu.memory_space<vmem>>, vector<1x8x8xbf16>
    tpu.vector_store %arg11[%c5, %c1_31, %c0_32], %76 {strides = array<i32>} : memref<6x10x8xbf16, #tpu.memory_space<vmem>>, vector<1x8x8xbf16>,
    %cst_33 = arith.constant 0.000000e+00 : bf16
    %78 = vector.broadcast %cst_33 : bf16 to vector<6x1x8xbf16>
    %c0_34 = arith.constant 0 : index
    %c0_35 = arith.constant 0 : index
    %c0_36 = arith.constant 0 : index
    %79 = vector.load %arg11[%c0_34, %c0_35, %c0_36] : memref<6x10x8xbf16, #tpu.memory_space<vmem>>, vector<6x1x8xbf16>
    tpu.vector_store %arg11[%c0_34, %c0_35, %c0_36], %78 {strides = array<i32>} : memref<6x10x8xbf16, #tpu.memory_space<vmem>>, vector<6x1x8xbf16>,
    %cst_37 = arith.constant 0.000000e+00 : bf16
    %80 = vector.broadcast %cst_37 : bf16 to vector<6x1x8xbf16>
    %c0_38 = arith.constant 0 : index
    %c9 = arith.constant 9 : index
    %c0_39 = arith.constant 0 : index
    %81 = vector.load %arg11[%c0_38, %c9, %c0_39] : memref<6x10x8xbf16, #tpu.memory_space<vmem>>, vector<6x1x8xbf16>
    tpu.vector_store %arg11[%c0_38, %c9, %c0_39], %80 {strides = array<i32>} : memref<6x10x8xbf16, #tpu.memory_space<vmem>>, vector<6x1x8xbf16>,
    %c0_40 = arith.constant 0 : index
    %c0_41 = arith.constant 0 : index
    %c0_42 = arith.constant 0 : index
    %82 = vector.load %arg11[%c0_40, %c0_41, %c0_42] : memref<6x10x8xbf16, #tpu.memory_space<vmem>>, vector<4x8x8xbf16>
    %83 = vector.shape_cast %82 : vector<4x8x8xbf16> to vector<32x8xbf16>
    %c0_43 = arith.constant 0 : index
    %c0_44 = arith.constant 0 : index
    %84 = vector.load %arg12[%c0_43, %c0_44] : memref<32x72xbf16, #tpu.memory_space<vmem>>, vector<32x8xbf16>
    tpu.vector_store %arg12[%c0_43, %c0_44], %83 {strides = array<i32>} : memref<32x72xbf16, #tpu.memory_space<vmem>>, vector<32x8xbf16>,
    %c0_45 = arith.constant 0 : index
    %c1_46 = arith.constant 1 : index
    %c0_47 = arith.constant 0 : index
    %85 = vector.load %arg11[%c0_45, %c1_46, %c0_47] : memref<6x10x8xbf16, #tpu.memory_space<vmem>>, vector<4x8x8xbf16>
    %86 = vector.shape_cast %85 : vector<4x8x8xbf16> to vector<32x8xbf16>
    %c0_48 = arith.constant 0 : index
    %c8 = arith.constant 8 : index
    %87 = vector.load %arg12[%c0_48, %c8] : memref<32x72xbf16, #tpu.memory_space<vmem>>, vector<32x8xbf16>
    tpu.vector_store %arg12[%c0_48, %c8], %86 {strides = array<i32>} : memref<32x72xbf16, #tpu.memory_space<vmem>>, vector<32x8xbf16>,
    %c0_49 = arith.constant 0 : index
    %c2 = arith.constant 2 : index
    %c0_50 = arith.constant 0 : index
    %88 = vector.load %arg11[%c0_49, %c2, %c0_50] : memref<6x10x8xbf16, #tpu.memory_space<vmem>>, vector<4x8x8xbf16>
    %89 = vector.shape_cast %88 : vector<4x8x8xbf16> to vector<32x8xbf16>
    %c0_51 = arith.constant 0 : index
    %c16 = arith.constant 16 : index
    %90 = vector.load %arg12[%c0_51, %c16] : memref<32x72xbf16, #tpu.memory_space<vmem>>, vector<32x8xbf16>
    tpu.vector_store %arg12[%c0_51, %c16], %89 {strides = array<i32>} : memref<32x72xbf16, #tpu.memory_space<vmem>>, vector<32x8xbf16>,
    %c1_52 = arith.constant 1 : index
    %c0_53 = arith.constant 0 : index
    %c0_54 = arith.constant 0 : index
    %91 = vector.load %arg11[%c1_52, %c0_53, %c0_54] : memref<6x10x8xbf16, #tpu.memory_space<vmem>>, vector<4x8x8xbf16>
    %92 = vector.shape_cast %91 : vector<4x8x8xbf16> to vector<32x8xbf16>
    %c0_55 = arith.constant 0 : index
    %c24 = arith.constant 24 : index
    %93 = vector.load %arg12[%c0_55, %c24] : memref<32x72xbf16, #tpu.memory_space<vmem>>, vector<32x8xbf16>
    tpu.vector_store %arg12[%c0_55, %c24], %92 {strides = array<i32>} : memref<32x72xbf16, #tpu.memory_space<vmem>>, vector<32x8xbf16>,
    %c1_56 = arith.constant 1 : index
    %c1_57 = arith.constant 1 : index
    %c0_58 = arith.constant 0 : index
    %94 = vector.load %arg11[%c1_56, %c1_57, %c0_58] : memref<6x10x8xbf16, #tpu.memory_space<vmem>>, vector<4x8x8xbf16>
    %95 = vector.shape_cast %94 : vector<4x8x8xbf16> to vector<32x8xbf16>
    %c0_59 = arith.constant 0 : index
    %c32 = arith.constant 32 : index
    %96 = vector.load %arg12[%c0_59, %c32] : memref<32x72xbf16, #tpu.memory_space<vmem>>, vector<32x8xbf16>
    tpu.vector_store %arg12[%c0_59, %c32], %95 {strides = array<i32>} : memref<32x72xbf16, #tpu.memory_space<vmem>>, vector<32x8xbf16>,
    %c1_60 = arith.constant 1 : index
    %c2_61 = arith.constant 2 : index
    %c0_62 = arith.constant 0 : index
    %97 = vector.load %arg11[%c1_60, %c2_61, %c0_62] : memref<6x10x8xbf16, #tpu.memory_space<vmem>>, vector<4x8x8xbf16>
    %98 = vector.shape_cast %97 : vector<4x8x8xbf16> to vector<32x8xbf16>
    %c0_63 = arith.constant 0 : index
    %c40 = arith.constant 40 : index
    %99 = vector.load %arg12[%c0_63, %c40] : memref<32x72xbf16, #tpu.memory_space<vmem>>, vector<32x8xbf16>
    tpu.vector_store %arg12[%c0_63, %c40], %98 {strides = array<i32>} : memref<32x72xbf16, #tpu.memory_space<vmem>>, vector<32x8xbf16>,
    %c2_64 = arith.constant 2 : index
    %c0_65 = arith.constant 0 : index
    %c0_66 = arith.constant 0 : index
    %100 = vector.load %arg11[%c2_64, %c0_65, %c0_66] : memref<6x10x8xbf16, #tpu.memory_space<vmem>>, vector<4x8x8xbf16>
    %101 = vector.shape_cast %100 : vector<4x8x8xbf16> to vector<32x8xbf16>
    %c0_67 = arith.constant 0 : index
    %c48 = arith.constant 48 : index
    %102 = vector.load %arg12[%c0_67, %c48] : memref<32x72xbf16, #tpu.memory_space<vmem>>, vector<32x8xbf16>
    tpu.vector_store %arg12[%c0_67, %c48], %101 {strides = array<i32>} : memref<32x72xbf16, #tpu.memory_space<vmem>>, vector<32x8xbf16>,
    %c2_68 = arith.constant 2 : index
    %c1_69 = arith.constant 1 : index
    %c0_70 = arith.constant 0 : index
    %103 = vector.load %arg11[%c2_68, %c1_69, %c0_70] : memref<6x10x8xbf16, #tpu.memory_space<vmem>>, vector<4x8x8xbf16>
    %104 = vector.shape_cast %103 : vector<4x8x8xbf16> to vector<32x8xbf16>
    %c0_71 = arith.constant 0 : index
    %c56 = arith.constant 56 : index
    %105 = vector.load %arg12[%c0_71, %c56] : memref<32x72xbf16, #tpu.memory_space<vmem>>, vector<32x8xbf16>
    tpu.vector_store %arg12[%c0_71, %c56], %104 {strides = array<i32>} : memref<32x72xbf16, #tpu.memory_space<vmem>>, vector<32x8xbf16>,
    %c2_72 = arith.constant 2 : index
    %c2_73 = arith.constant 2 : index
    %c0_74 = arith.constant 0 : index
    %106 = vector.load %arg11[%c2_72, %c2_73, %c0_74] : memref<6x10x8xbf16, #tpu.memory_space<vmem>>, vector<4x8x8xbf16>
    %107 = vector.shape_cast %106 : vector<4x8x8xbf16> to vector<32x8xbf16>
    %c0_75 = arith.constant 0 : index
    %c64 = arith.constant 64 : index
    %108 = vector.load %arg12[%c0_75, %c64] : memref<32x72xbf16, #tpu.memory_space<vmem>>, vector<32x8xbf16>
    tpu.vector_store %arg12[%c0_75, %c64], %107 {strides = array<i32>} : memref<32x72xbf16, #tpu.memory_space<vmem>>, vector<32x8xbf16>,
    %c0_76 = arith.constant 0 : index
    %c0_77 = arith.constant 0 : index
    %109 = vector.load %arg12[%c0_76, %c0_77] : memref<32x72xbf16, #tpu.memory_space<vmem>>, vector<32x72xbf16>
    %c0_78 = arith.constant 0 : index
    %c0_79 = arith.constant 0 : index
    %110 = vector.load %arg7[%c0_78, %c0_79] : memref<72x8xbf16, #tpu.memory_space<vmem>>, vector<72x8xbf16>
    %cst_80 = arith.constant dense<0.000000e+00> : vector<32x8xf32>
    %111 = tpu.matmul %109, %110, %cst_80 {dimension_numbers = #tpu.dot_dimension_numbers<[1], [0], [0], [1], [0, 0, 1, 1], [], []>} : vector<32x72xbf16>, vector<72x8xbf16>, vector<32x8xf32> -> vector<32x8xf32>
    %c0_81 = arith.constant 0 : index
    %c0_82 = arith.constant 0 : index
    %112 = vector.load %arg8[%c0_81, %c0_82] : memref<1x8xf32, #tpu.memory_space<vmem>>, vector<1x8xf32>
    %113 = vector.broadcast %112 : vector<1x8xf32> to vector<32x8xf32>
    %114 = arith.addf %111, %113 : vector<32x8xf32>
    %cst_83 = arith.constant 0.000000e+00 : f32
    %115 = vector.broadcast %cst_83 : f32 to vector<32x8xf32>
    %116 = arith.maximumf %114, %115 : vector<32x8xf32>
    %117 = arith.truncf %116 : vector<32x8xf32> to vector<32x8xbf16>
    %c0_84 = arith.constant 0 : index
    %118 = arith.index_cast %0 : i32 to index
    %c0_85 = arith.constant 0 : index
    %c0_86 = arith.constant 0 : index
    %119 = vector.load %arg2[%c0_84, %118, %c0_85, %c0_86] : memref<1x8x8x16xbf16, #tpu.memory_space<vmem>>, vector<1x4x8x16xbf16>
    %120 = arith.extf %119 : vector<1x4x8x16xbf16> to vector<1x4x8x16xf32>
    %121 = vector.shape_cast %120 : vector<1x4x8x16xf32> to vector<32x16xf32>
    %122 = vector.broadcast %1 : vector<1x16xf32> to vector<32x16xf32>
    %123 = arith.mulf %121, %122 : vector<32x16xf32>
    %124 = vector.broadcast %2 : vector<1x16xf32> to vector<32x16xf32>
    %125 = arith.addf %123, %124 : vector<32x16xf32>
    %cst_87 = arith.constant 0.000000e+00 : f32
    %126 = vector.broadcast %cst_87 : f32 to vector<32x16xf32>
    %127 = arith.maximumf %125, %126 : vector<32x16xf32>
    %128 = arith.truncf %127 : vector<32x16xf32> to vector<32x16xbf16>
    %129 = tpu.concatenate %117, %128 in 1 : vector<32x8xbf16>, vector<32x16xbf16> -> vector<32x24xbf16>
    %c0_88 = arith.constant 0 : index
    %c0_89 = arith.constant 0 : index
    %130 = vector.load %arg9[%c0_88, %c0_89] : memref<24x32xbf16, #tpu.memory_space<vmem>>, vector<24x32xbf16>
    %cst_90 = arith.constant dense<0.000000e+00> : vector<32x32xf32>
    %131 = tpu.matmul %129, %130, %cst_90 {dimension_numbers = #tpu.dot_dimension_numbers<[1], [0], [0], [1], [0, 0, 1, 1], [], []>} : vector<32x24xbf16>, vector<24x32xbf16>, vector<32x32xf32> -> vector<32x32xf32>
    %132 = vector.shape_cast %131 : vector<32x32xf32> to vector<1x4x8x32xf32>
    %133 = arith.truncf %132 : vector<1x4x8x32xf32> to vector<1x4x8x32xbf16>
    %c0_91 = arith.constant 0 : index
    %c0_92 = arith.constant 0 : index
    %c0_93 = arith.constant 0 : index
    %c0_94 = arith.constant 0 : index
    %134 = vector.load %arg10[%c0_91, %c0_92, %c0_93, %c0_94] : memref<1x4x8x32xbf16, #tpu.memory_space<vmem>>, vector<1x4x8x32xbf16>
    tpu.vector_store %arg10[%c0_91, %c0_92, %c0_93, %c0_94], %133 {strides = array<i32>} : memref<1x4x8x32xbf16, #tpu.memory_space<vmem>>, vector<1x4x8x32xbf16>,
    return
  }
  func.func @transform_0(%arg0: i32, %arg1: i32) -> (i32, i32, i32, i32) {
    %c0_i32 = arith.constant 0 : i32
    %c0_i32_0 = arith.constant 0 : i32
    %c0_i32_1 = arith.constant 0 : i32
    %c0_i32_2 = arith.constant 0 : i32
    return %arg0, %c0_i32, %c0_i32_0, %c0_i32_1 : i32, i32, i32, i32
  }
  func.func @transform_1(%arg0: i32, %arg1: i32) -> (i32, i32) {
    %c0_i32 = arith.constant 0 : i32
    %c0_i32_0 = arith.constant 0 : i32
    %c0_i32_1 = arith.constant 0 : i32
    return %c0_i32, %c0_i32_0 : i32, i32
  }
  func.func @transform_2(%arg0: i32, %arg1: i32) -> (i32, i32) {
    %c0_i32 = arith.constant 0 : i32
    %c0_i32_0 = arith.constant 0 : i32
    %c0_i32_1 = arith.constant 0 : i32
    return %c0_i32, %c0_i32_0 : i32, i32
  }
  func.func @transform_3(%arg0: i32, %arg1: i32) -> (i32, i32) {
    %c0_i32 = arith.constant 0 : i32
    %c0_i32_0 = arith.constant 0 : i32
    %c0_i32_1 = arith.constant 0 : i32
    return %c0_i32, %c0_i32_0 : i32, i32
  }
  func.func @transform_4(%arg0: i32, %arg1: i32) -> (i32, i32) {
    %c0_i32 = arith.constant 0 : i32
    %c0_i32_0 = arith.constant 0 : i32
    %c0_i32_1 = arith.constant 0 : i32
    return %c0_i32, %c0_i32_0 : i32, i32
  }
  func.func @transform_5(%arg0: i32, %arg1: i32) -> (i32, i32) {
    %c0_i32 = arith.constant 0 : i32
    %c0_i32_0 = arith.constant 0 : i32
    %c0_i32_1 = arith.constant 0 : i32
    return %c0_i32, %c0_i32_0 : i32, i32
  }
  func.func @transform_6(%arg0: i32, %arg1: i32) -> (i32, i32) {
    %c0_i32 = arith.constant 0 : i32
    %c0_i32_0 = arith.constant 0 : i32
    %c0_i32_1 = arith.constant 0 : i32
    return %c0_i32, %c0_i32_0 : i32, i32
  }
  func.func @transform_7(%arg0: i32, %arg1: i32) -> (i32, i32) {
    %c0_i32 = arith.constant 0 : i32
    %c0_i32_0 = arith.constant 0 : i32
    %c0_i32_1 = arith.constant 0 : i32
    return %c0_i32, %c0_i32_0 : i32, i32
  }
  func.func @transform_8(%arg0: i32, %arg1: i32) -> (i32, i32, i32, i32) {
    %c0_i32 = arith.constant 0 : i32
    %c0_i32_0 = arith.constant 0 : i32
    %c0_i32_1 = arith.constant 0 : i32
    return %arg0, %arg1, %c0_i32, %c0_i32_0 : i32, i32, i32, i32
  }
}

</mosaic_0001>

<llo_original>
// kernel: tpu_custom_call.1
$region0: #{tpu_custom_call.1}
  #allocation0 [shape = 'u32[]', space=smem, size = 0x4, offset = 0x4, fixed_abs, tag = 'smem constant byte address 0x4 - core index']
  #allocation1 [shape = 'u32[144,128]{1,0:T(1,128)}', space=vmem, size = 0x12000, scoped, tag = 'internal scratch']
  #allocation2 [shape = 'bf16[6,10,8]{2,1,0:T(8,128)(2,1)}', space=vmem, size = 0x6000, scoped, tag = 'scratch operand']
  #allocation3 [shape = 'bf16[32,72]{1,0:T(8,128)(2,1)}', space=vmem, size = 0x2000, scoped, tag = 'scratch operand']
  %s0 = inlined_call_operand.hbm [shape: bf16[2,8,8,16], index: 0, kind: input, shape index: {}]
  %s1 = inlined_call_operand.vmem [shape: f32[1,16], index: 1, kind: input, shape index: {}]
  %s2 = inlined_call_operand.vmem [shape: f32[1,16], index: 2, kind: input, shape index: {}]
  %s3 = inlined_call_operand.vmem [shape: bf16[16,8], index: 3, kind: input, shape index: {}]
  %s4 = inlined_call_operand.vmem [shape: f32[1,8], index: 4, kind: input, shape index: {}]
  %s5 = inlined_call_operand.vmem [shape: bf16[72,8], index: 5, kind: input, shape index: {}]
  %s6 = inlined_call_operand.vmem [shape: f32[1,8], index: 6, kind: input, shape index: {}]
  %s7 = inlined_call_operand.vmem [shape: bf16[24,32], index: 7, kind: input, shape index: {}]
  %s8 = inlined_call_operand.hbm [shape: bf16[2,8,8,32], index: 8, kind: output, shape index: {}]
  %s9 = sld [smem:[#allocation0]]
  $region69: #{tpu_custom_call.1} parent=0
    _
  %s11 = ssub.s32 1, %s9
  %s12 = scalar_select 0, %s11, %s9
  $region1: #{tpu_custom_call.1} parent=0
    #allocation4 [shape = 'u8[32768]{0}', space=vmem, size = 0x8000, scoped, tag = 'input window, operand 0']
    #allocation5 [shape = 's32[2]{0}', space=sflag, size = 0x8, scoped, tag = 'scoped memory for tpu_custom_call.1']
    #allocation6 [shape = 's32[2]{0}', space=sflag, size = 0x8, scoped, tag = 'scoped memory for tpu_custom_call.1']
    #allocation7 [shape = 'u8[16384]{0}', space=vmem, size = 0x4000, scoped, tag = 'output window, operand 0']
    %13 = vsyncpa [#allocation5], 0
    %s14 = scalar_lea.sflag [#allocation5], 1
    %15 = vsyncpa %s14, 0
    %16 = vsyncpa [#allocation6], 0
    %s17 = scalar_lea.sflag [#allocation6], 1
    %18 = vsyncpa %s17, 0
    loop: start=0, step=1, limit=6
    $region2: #{tpu_custom_call.1} parent=1 // loop_pre_header
      _
    $region3: #{tpu_custom_call.1} parent=1 // loop_header
      %s20 = sphi 0, %s24
      %p21 = scmp.ge.s32.totalorder %s20, 6
      %s27 = sphi 0, %s39
      %s28 = sphi 0, %s35
      %s29 = sphi 0, %s27
      %s30 = sphi 0, %s28
      %s31 = sphi 0, %s29
      %s32 = sphi 0, %s30
      %s42 = sphi 0, %s44
      %s45 = sphi 0, %s42
      %s46 = sphi 0, %s45
      %s62 = sphi 0, %s46
      %s66 = sphi 0, %s66
      %s68 = sphi 0, %s66
      %s69 = sphi 0, %s68
      %s83 = sphi 0, %s69
      %s87 = sphi 0, %s87
      %s89 = sphi 0, %s87
      %s90 = sphi 0, %s89
      %s104 = sphi 0, %s90
      %s108 = sphi 0, %s108
      %s110 = sphi 0, %s108
      %s111 = sphi 0, %s110
      %s125 = sphi 0, %s111
      %s129 = sphi 0, %s129
      %s131 = sphi 0, %s129
      %s132 = sphi 0, %s131
      %s146 = sphi 0, %s132
      %s150 = sphi 0, %s150
      %s152 = sphi 0, %s150
      %s153 = sphi 0, %s152
      %s167 = sphi 0, %s153
      %s171 = sphi 0, %s171
      %s173 = sphi 0, %s171
      %s174 = sphi 0, %s173
      %s188 = sphi 0, %s174
      %s192 = sphi 0, %s192
      %s194 = sphi 0, %s192
      %s195 = sphi 0, %s194
      %s209 = sphi 0, %s195
      %s217 = sphi 0, %s219
      %s220 = sphi 0, %s217
      %s221 = sphi 0, %s220
      %s237 = sphi 0, %s221
    $region4: #{tpu_custom_call.1} parent=1 // loop_header_branch
      %23 = sbr.rel (%p21) target = $region8
    $region5: #{tpu_custom_call.1} parent=1 // loop_body
      %s25 = ssub.s32 %s20, 1
      %s26 = ssub.s32 %s20, 2
      %s33 = sadd.s32 1, %s28
      %p34 = scmp.ge.s32.totalorder %s33, 2
      %s35 = scalar_select %p34, 0, %s33
      %s36 = sadd.s32 1, %s27
      %s37 = scalar_select %p34, %s36, %s27
      %p38 = scmp.ge.s32.totalorder %s37, 2
      %s39 = scalar_select %p38, 0, %s37
      %s40 = ssub.s32 %s27, %s39
      %p41 = scmp.eq.s32.totalorder %s40, 0
      %s43 = sadd.s32 %s42, 1
      %s44 = scalar_select %p41, %s42, %s43
      %p47 = pneg %p41
      %p48 = scmp.eq.s32.totalorder %s20, 3
      %p49 = por %p47, %p48
      %p50 = scmp.ne.s32.totalorder %s42, %s45
      %p51 = scmp.eq.s32.totalorder %s20, 0
      %p52 = por %p50, %p51
      %p53 = scmp.ne.s32.totalorder %s42, %s45
      %p54 = scmp.eq.s32.totalorder %s25, 3
      %p55 = por %p53, %p54
      %p56 = scmp.ne.s32.totalorder %s45, %s46
      %p57 = scmp.eq.s32.totalorder %s25, 0
      %p58 = por %p56, %p57
      %p59 = scmp.ne.s32.totalorder %s45, %s46
      %p60 = scmp.eq.s32.totalorder %s26, 3
      %p61 = por %p59, %p60
      %p63 = scmp.ne.s32.totalorder %s46, %s62
      %p64 = scmp.eq.s32.totalorder %s26, 0
      %p65 = por %p63, %p64
      %s67 = sadd.s32 %s66, 1
      %p70 = scmp.eq.s32.totalorder %s20, 3
      %p71 = scmp.ne.s32.totalorder %s66, %s68
      %p72 = scmp.eq.s32.totalorder %s20, 0
      %p73 = por %p71, %p72
      %p74 = scmp.ne.s32.totalorder %s66, %s68
      %p75 = scmp.eq.s32.totalorder %s25, 3
      %p76 = por %p74, %p75
      %p77 = scmp.ne.s32.totalorder %s68, %s69
      %p78 = scmp.eq.s32.totalorder %s25, 0
      %p79 = por %p77, %p78
      %p80 = scmp.ne.s32.totalorder %s68, %s69
      %p81 = scmp.eq.s32.totalorder %s26, 3
      %p82 = por %p80, %p81
      %p84 = scmp.ne.s32.totalorder %s69, %s83
      %p85 = scmp.eq.s32.totalorder %s26, 0
      %p86 = por %p84, %p85
      %s88 = sadd.s32 %s87, 1
      %p91 = scmp.eq.s32.totalorder %s20, 3
      %p92 = scmp.ne.s32.totalorder %s87, %s89
      %p93 = scmp.eq.s32.totalorder %s20, 0
      %p94 = por %p92, %p93
      %p95 = scmp.ne.s32.totalorder %s87, %s89
      %p96 = scmp.eq.s32.totalorder %s25, 3
      %p97 = por %p95, %p96
      %p98 = scmp.ne.s32.totalorder %s89, %s90
      %p99 = scmp.eq.s32.totalorder %s25, 0
      %p100 = por %p98, %p99
      %p101 = scmp.ne.s32.totalorder %s89, %s90
      %p102 = scmp.eq.s32.totalorder %s26, 3
      %p103 = por %p101, %p102
      %p105 = scmp.ne.s32.totalorder %s90, %s104
      %p106 = scmp.eq.s32.totalorder %s26, 0
      %p107 = por %p105, %p106
      %s109 = sadd.s32 %s108, 1
      %p112 = scmp.eq.s32.totalorder %s20, 3
      %p113 = scmp.ne.s32.totalorder %s108, %s110
      %p114 = scmp.eq.s32.totalorder %s20, 0
      %p115 = por %p113, %p114
      %p116 = scmp.ne.s32.totalorder %s108, %s110
      %p117 = scmp.eq.s32.totalorder %s25, 3
      %p118 = por %p116, %p117
      %p119 = scmp.ne.s32.totalorder %s110, %s111
      %p120 = scmp.eq.s32.totalorder %s25, 0
      %p121 = por %p119, %p120
      %p122 = scmp.ne.s32.totalorder %s110, %s111
      %p123 = scmp.eq.s32.totalorder %s26, 3
      %p124 = por %p122, %p123
      %p126 = scmp.ne.s32.totalorder %s111, %s125
      %p127 = scmp.eq.s32.totalorder %s26, 0
      %p128 = por %p126, %p127
      %s130 = sadd.s32 %s129, 1
      %p133 = scmp.eq.s32.totalorder %s20, 3
      %p134 = scmp.ne.s32.totalorder %s129, %s131
      %p135 = scmp.eq.s32.totalorder %s20, 0
      %p136 = por %p134, %p135
      %p137 = scmp.ne.s32.totalorder %s129, %s131
      %p138 = scmp.eq.s32.totalorder %s25, 3
      %p139 = por %p137, %p138
      %p140 = scmp.ne.s32.totalorder %s131, %s132
      %p141 = scmp.eq.s32.totalorder %s25, 0
      %p142 = por %p140, %p141
      %p143 = scmp.ne.s32.totalorder %s131, %s132
      %p144 = scmp.eq.s32.totalorder %s26, 3
      %p145 = por %p143, %p144
      %p147 = scmp.ne.s32.totalorder %s132, %s146
      %p148 = scmp.eq.s32.totalorder %s26, 0
      %p149 = por %p147, %p148
      %s151 = sadd.s32 %s150, 1
      %p154 = scmp.eq.s32.totalorder %s20, 3
      %p155 = scmp.ne.s32.totalorder %s150, %s152
      %p156 = scmp.eq.s32.totalorder %s20, 0
      %p157 = por %p155, %p156
      %p158 = scmp.ne.s32.totalorder %s150, %s152
      %p159 = scmp.eq.s32.totalorder %s25, 3
      %p160 = por %p158, %p159
      %p161 = scmp.ne.s32.totalorder %s152, %s153
      %p162 = scmp.eq.s32.totalorder %s25, 0
      %p163 = por %p161, %p162
      %p164 = scmp.ne.s32.totalorder %s152, %s153
      %p165 = scmp.eq.s32.totalorder %s26, 3
      %p166 = por %p164, %p165
      %p168 = scmp.ne.s32.totalorder %s153, %s167
      %p169 = scmp.eq.s32.totalorder %s26, 0
      %p170 = por %p168, %p169
      %s172 = sadd.s32 %s171, 1
      %p175 = scmp.eq.s32.totalorder %s20, 3
      %p176 = scmp.ne.s32.totalorder %s171, %s173
      %p177 = scmp.eq.s32.totalorder %s20, 0
      %p178 = por %p176, %p177
      %p179 = scmp.ne.s32.totalorder %s171, %s173
      %p180 = scmp.eq.s32.totalorder %s25, 3
      %p181 = por %p179, %p180
      %p182 = scmp.ne.s32.totalorder %s173, %s174
      %p183 = scmp.eq.s32.totalorder %s25, 0
      %p184 = por %p182, %p183
      %p185 = scmp.ne.s32.totalorder %s173, %s174
      %p186 = scmp.eq.s32.totalorder %s26, 3
      %p187 = por %p185, %p186
      %p189 = scmp.ne.s32.totalorder %s174, %s188
      %p190 = scmp.eq.s32.totalorder %s26, 0
      %p191 = por %p189, %p190
      %s193 = sadd.s32 %s192, 1
      %p196 = scmp.eq.s32.totalorder %s20, 3
      %p197 = scmp.ne.s32.totalorder %s192, %s194
      %p198 = scmp.eq.s32.totalorder %s20, 0
      %p199 = por %p197, %p198
      %p200 = scmp.ne.s32.totalorder %s192, %s194
      %p201 = scmp.eq.s32.totalorder %s25, 3
      %p202 = por %p200, %p201
      %p203 = scmp.ne.s32.totalorder %s194, %s195
      %p204 = scmp.eq.s32.totalorder %s25, 0
      %p205 = por %p203, %p204
      %p206 = scmp.ne.s32.totalorder %s194, %s195
      %p207 = scmp.eq.s32.totalorder %s26, 3
      %p208 = por %p206, %p207
      %p210 = scmp.ne.s32.totalorder %s195, %s209
      %p211 = scmp.eq.s32.totalorder %s26, 0
      %p212 = por %p210, %p211
      %s213 = ssub.s32 %s27, %s39
      %s214 = ssub.s32 %s28, %s35
      %s215 = sor.u32 %s213, %s214
      %p216 = scmp.eq.s32.totalorder %s215, 0
      %s218 = sadd.s32 %s217, 1
      %s219 = scalar_select %p216, %s217, %s218
      %p222 = pneg %p216
      %p223 = scmp.eq.s32.totalorder %s20, 3
      %p224 = por %p222, %p223
      %p225 = scmp.ne.s32.totalorder %s217, %s220
      %p226 = scmp.eq.s32.totalorder %s20, 0
      %p227 = por %p225, %p226
      %p228 = scmp.ne.s32.totalorder %s217, %s220
      %p229 = scmp.eq.s32.totalorder %s25, 3
      %p230 = por %p228, %p229
      %p231 = scmp.ne.s32.totalorder %s220, %s221
      %p232 = scmp.eq.s32.totalorder %s25, 0
      %p233 = por %p231, %p232
      %p234 = scmp.ne.s32.totalorder %s220, %s221
      %p235 = scmp.eq.s32.totalorder %s26, 3
      %p236 = por %p234, %p235
      %p238 = scmp.ne.s32.totalorder %s221, %s237
      %p239 = scmp.eq.s32.totalorder %s26, 0
      %p240 = por %p238, %p239
      %p241 = scmp.le.s32.totalorder 1, %s20
      %p242 = scmp.lt.s32.totalorder %s20, 5
      %p243 = pnand %p241, %p242
      %p244 = pneg %p243
      // Predicated region
      $region9: #{tpu_custom_call.1} parent=5 // pred_check
        _
      $region10: #{tpu_custom_call.1} parent=5 // pred_check_branch
        %246 = sbr.rel (%p243) target = $region12
      $region11: #{tpu_custom_call.1} parent=5 // pred_region
        %s247 = ssub.s32 %s20, 1
        // Predicated region
        $region13: #{tpu_custom_call.1} parent=11 // pred_check
          %p248 = pneg %p79
        $region14: #{tpu_custom_call.1} parent=11 // pred_check_branch
          %250 = sbr.rel (%p248) target = $region16
        $region15: #{tpu_custom_call.1} parent=11 // pred_region
          _
        $region16: #{tpu_custom_call.1} parent=11 // pred_fallthru
          _
        // Predicated region
        $region17: #{tpu_custom_call.1} parent=11 // pred_check
          %p251 = pneg %p100
        $region18: #{tpu_custom_call.1} parent=11 // pred_check_branch
          %253 = sbr.rel (%p251) target = $region20
        $region19: #{tpu_custom_call.1} parent=11 // pred_region
          _
        $region20: #{tpu_custom_call.1} parent=11 // pred_fallthru
          _
        // Predicated region
        $region21: #{tpu_custom_call.1} parent=11 // pred_check
          %p254 = pneg %p121
        $region22: #{tpu_custom_call.1} parent=11 // pred_check_branch
          %256 = sbr.rel (%p254) target = $region24
        $region23: #{tpu_custom_call.1} parent=11 // pred_region
          _
        $region24: #{tpu_custom_call.1} parent=11 // pred_fallthru
          _
        // Predicated region
        $region25: #{tpu_custom_call.1} parent=11 // pred_check
          %p257 = pneg %p142
        $region26: #{tpu_custom_call.1} parent=11 // pred_check_branch
          %259 = sbr.rel (%p257) target = $region28
        $region27: #{tpu_custom_call.1} parent=11 // pred_region
          _
        $region28: #{tpu_custom_call.1} parent=11 // pred_fallthru
          _
        // Predicated region
        $region29: #{tpu_custom_call.1} parent=11 // pred_check
          %p260 = pneg %p163
        $region30: #{tpu_custom_call.1} parent=11 // pred_check_branch
          %262 = sbr.rel (%p260) target = $region32
        $region31: #{tpu_custom_call.1} parent=11 // pred_region
          _
        $region32: #{tpu_custom_call.1} parent=11 // pred_fallthru
          _
        // Predicated region
        $region33: #{tpu_custom_call.1} parent=11 // pred_check
          %p263 = pneg %p184
        $region34: #{tpu_custom_call.1} parent=11 // pred_check_branch
          %265 = sbr.rel (%p263) target = $region36
        $region35: #{tpu_custom_call.1} parent=11 // pred_region
          _
        $region36: #{tpu_custom_call.1} parent=11 // pred_fallthru
          _
        // Predicated region
        $region37: #{tpu_custom_call.1} parent=11 // pred_check
          %p266 = pneg %p205
        $region38: #{tpu_custom_call.1} parent=11 // pred_check_branch
          %268 = sbr.rel (%p266) target = $region40
        $region39: #{tpu_custom_call.1} parent=11 // pred_region
          _
        $region40: #{tpu_custom_call.1} parent=11 // pred_fallthru
          _
      $region12: #{tpu_custom_call.1} parent=5 // pred_fallthru
        _
      %p269 = scmp.lt.s32.totalorder %s20, 4
      // Predicated region
      $region41: #{tpu_custom_call.1} parent=5 // pred_check
        %p270 = pneg %p269
      $region42: #{tpu_custom_call.1} parent=5 // pred_check_branch
        %272 = sbr.rel (%p270) target = $region44
      $region43: #{tpu_custom_call.1} parent=5 // pred_region
        // Predicated region
        $region45: #{tpu_custom_call.1} parent=43 // pred_check
          %p273 = pneg %p52
        $region46: #{tpu_custom_call.1} parent=43 // pred_check_branch
          %275 = sbr.rel (%p273) target = $region48
        $region47: #{tpu_custom_call.1} parent=43 // pred_region
          %s276 = sand.u32 %s42, 1
          %s277 = scalar_lea.sflag [#allocation5], %s276
          %s278 = sand.u32 %s42, 1
          %s279 = smul.addr %s278, 32
          %s280 = scalar_lea.vmem [#allocation4], %s279
          %s282 = ssub.s32 512, 512
          %283 = vsyncadd %s277, %s282
          %s284 = smul.addr %s27, 8
          %s285 = smul.addr %s284, 64
          %s286 = scalar_lea.hbm %s0, %s285
          %s287 = sshll.u32 %s280, 4
          %s288 = int_to_ptr.vmem [resolvable:$true] %s287
          %293 = dma.hbm_to_vmem [thread:$0]  %s286, 512, %s288, %s277, 64, 64, 4
        $region48: #{tpu_custom_call.1} parent=43 // pred_fallthru
          _
      $region44: #{tpu_custom_call.1} parent=5 // pred_fallthru
        _
      %p294 = scmp.le.s32.totalorder 1, %s20
      %p295 = scmp.lt.s32.totalorder %s20, 5
      %p296 = pnand %p294, %p295
      %p297 = pneg %p296
      // Predicated region
      $region49: #{tpu_custom_call.1} parent=5 // pred_check
        _
      $region50: #{tpu_custom_call.1} parent=5 // pred_check_branch
        %299 = sbr.rel (%p296) target = $region52
      $region51: #{tpu_custom_call.1} parent=5 // pred_region
        %s300 = ssub.s32 %s20, 1
        %s301 = sand.u32 %s45, 1
        %s302 = scalar_lea.sflag [#allocation5], %s301
        %s303 = sand.u32 %s45, 1
        %s304 = smul.addr %s303, 32
        %s305 = scalar_lea.vmem [#allocation4], %s304
        // Predicated region
        $region53: #{tpu_custom_call.1} parent=51 // pred_check
          %p306 = pneg %p58
        $region54: #{tpu_custom_call.1} parent=51 // pred_check_branch
          %308 = sbr.rel (%p306) target = $region56
        $region55: #{tpu_custom_call.1} parent=51 // pred_region
          %309 = dma.done %s302, 512
        $region56: #{tpu_custom_call.1} parent=51 // pred_fallthru
          _
        %s310 = sand.u32 %s45, 1
        %s311 = scalar_lea.sflag [#allocation5], %s310
        %s312 = sand.u32 %s45, 1
        %s313 = smul.addr %s312, 32
        %s314 = scalar_lea.vmem [#allocation4], %s313
        %p315 = pneg %p58
        %p316 = pneg %p55
        %p317 = pneg %p79
        %p318 = pneg %p76
        %p319 = pneg %p100
        %p320 = pneg %p97
        %p321 = pneg %p121
        %p322 = pneg %p118
        %p323 = pneg %p142
        %p324 = pneg %p139
        %p325 = pneg %p163
        %p326 = pneg %p160
        %p327 = pneg %p184
        %p328 = pneg %p181
        %p329 = pneg %p205
        %p330 = pneg %p202
        %p331 = pneg %p233
        %p332 = pneg %p230
        %s333 = sand.u32 %s220, 1
        %s334 = scalar_lea.sflag [#allocation6], %s333
        %s335 = sand.u32 %s220, 1
        %s336 = smul.addr %s335, 16
        %s337 = scalar_lea.vmem [#allocation7], %s336
        %s338 = smul.u32 4, %s30
        %s340 = smul.u32 %s30, 4
        %v341 = vld [vmem:[%s1] sm:$0x1]
        %v342 = vld [vmem:[%s2] sm:$0x1]
        %v343 = vld [vmem:[%s3] sm:$0xf]
        %v344 = vld [vmem:[%s3 + $0x4] sm:$0xf]
        %v345 = vld [vmem:[%s4] sm:$0x1]
        %s346 = smul.addr %s340, 4
        %s347 = scalar_lea.vmem %s305, %s346 [#allocation4]
        %v348 = vld [vmem:[%s347] sm:$0xf]
        %v349 = vld [vmem:[%s347 + $0x4] sm:$0xf]
        %v350 = vld [vmem:[%s347 + $0x8] sm:$0xf]
        %v351 = vld [vmem:[%s347 + $0xc] sm:$0xf]
        %v352 = vunpack.c.l.bf16 %v348
        %v353 = vunpack.c.l.bf16 %v349
        %v354 = vunpack.c.l.bf16 %v350
        %v355 = vunpack.c.l.bf16 %v351
        %v357 = vlaneseq
        %v358 = vshrl.u32 %v357, 7
        %v359 = vsub.s32 0, %v358
        %v360 = vrot.slane %v341, %v359
        %v362 = vmul.f32 %v352, %v360
        %v363 = vmul.f32 %v353, %v360
        %v364 = vmul.f32 %v354, %v360
        %v365 = vmul.f32 %v355, %v360
        %v367 = vlaneseq
        %v368 = vshrl.u32 %v367, 7
        %v369 = vsub.s32 0, %v368
        %v370 = vrot.slane %v342, %v369
        %v372 = vadd.f32 %v362, %v370
        %v373 = vadd.f32 %v363, %v370
        %v374 = vadd.f32 %v364, %v370
        %v375 = vadd.f32 %v365, %v370
        %v376 = vmax.f32 %v372, 0.0
        %v377 = vmax.f32 %v373, 0.0
        %v378 = vmax.f32 %v374, 0.0
        %v379 = vmax.f32 %v375, 0.0
        %v380 = vpack.c.bf16 %v377, %v376
        %v381 = vpack.c.bf16 %v379, %v378
        %v383 = vlaneseq
        %v384 = vshrl.u32 %v383, 7
        %v385 = vsub.s32 0, %v384
        %v386 = vrot.slane %v345, %v385
        %v390 = vunpack.c.l.b16 %v343
        %v391 = vunpack.c.l.b16 %v344
        %v392 = vpack.c.b16 %v391, %v390
        %vm394 = vcmask 130048
        %v396 = vsel %vm394, %v380, 0
        %v399 = vsel %vm394, %v381, 0
        %401 = vmatprep.subr.bf16.mxu0 0
        %402 = vmatpush1.bf16.msra.mxu0 0
        %403 = vmatprep.subr.bf16.mxu0 0
        %404 = vmatpush1.bf16.msra.mxu0 0
        %405 = vmatprep.subr.bf16.mxu0 0
        %406 = vmatpush1.bf16.msra.mxu0 0
        %407 = vmatprep.subr.bf16.mxu0 0
        %408 = vmatpush1.bf16.msra.mxu0 0
        %409 = vmatprep.subr.bf16.mxu0 0
        %410 = vmatpush1.bf16.msra.mxu0 0
        %411 = vmatprep.subr.bf16.mxu0 0
        %412 = vmatpush1.bf16.msra.mxu0 0
        %413 = vmatprep.subr.bf16.mxu0 0
        %414 = vmatpush1.bf16.msra.mxu0 0
        %415 = vmatprep.subr.bf16.mxu0 0
        %416 = vmatpush1.bf16.msra.mxu0 %v392
        %417 = vmatprep.subr.bf16.mxu0 0
        %418 = vmatpush2.bf16.msra.mxu0 0
        %419 = vmatprep.subr.bf16.mxu0 0
        %420 = vmatpush2.bf16.msra.mxu0 0
        %421 = vmatprep.subr.bf16.mxu0 0
        %422 = vmatpush2.bf16.msra.mxu0 0
        %423 = vmatprep.subr.bf16.mxu0 0
        %424 = vmatpush2.bf16.msra.mxu0 0
        %425 = vmatprep.subr.bf16.mxu0 0
        %426 = vmatpush2.bf16.msra.mxu0 0
        %427 = vmatprep.subr.bf16.mxu0 0
        %428 = vmatpush2.bf16.msra.mxu0 0
        %429 = vmatprep.subr.bf16.mxu0 0
        %430 = vmatpush2.bf16.msra.mxu0 0
        %431 = vmatprep.subr.bf16.mxu0 0
        %432 = vmatpush2.bf16.msra.mxu0 0
        %433 = vmatprep.mubr.bf16.mxu0 0
        %434 = vmatmul.mubr.bf16.gmra.mxu0 %v396
        %v435 = vpop.f32.mrf.mxu0
        %v436 = vadd.f32 %v386, %v435
        %v437 = vpop.f32.mrf.mxu0
        %v438 = vpop.f32.mrf.mxu0
        %v439 = vadd.f32 %v386, %v438
        %v440 = vpop.f32.mrf.mxu0
        %441 = vmatprep.mubr.bf16.mxu0 0
        %442 = vmatmul.mubr.bf16.gmra.mxu0 %v399
        %v443 = vpop.f32.mrf.mxu0
        %v444 = vadd.f32 %v386, %v443
        %v445 = vpop.f32.mrf.mxu0
        %v446 = vpop.f32.mrf.mxu0
        %v447 = vadd.f32 %v386, %v446
        %v448 = vpop.f32.mrf.mxu0
        %449 = vdwg.mxu0
        %v450 = vmax.f32 %v436, 0.0
        %v451 = vmax.f32 %v439, 0.0
        %v452 = vmax.f32 %v444, 0.0
        %v453 = vmax.f32 %v447, 0.0
        %v454 = vpack.c.bf16 %v451, %v450
        %v455 = vpack.c.bf16 %v453, %v452
        %v458 = vunpack.c.l.b16 %v454
        %v459 = vunpack.c.h.b16 %v454
        %v460 = vunpack.c.l.b16 %v455
        %v461 = vunpack.c.h.b16 %v455
        %v462 = vpack.c.b16 %v458, %v458
        %v463 = vpack.c.b16 %v459, %v459
        %v464 = vpack.c.b16 %v460, %v460
        %v465 = vpack.c.b16 %v461, %v461
        %v467 = vshrl.u32 %v462, 16
        %v469 = vrot.slane %v467, 7
        %v470 = vshll.u32 %v462, 16
        %v472 = vor.u32 %v469, %v470
        %v473 = vrot.slane %v469, 4
        %v475 = vshrl.u32 %v463, 16
        %v477 = vrot.slane %v475, 7
        %v478 = vshll.u32 %v463, 16
        %v480 = vor.u32 %v477, %v478
        %v481 = vrot.slane %v477, 4
        %v483 = vshrl.u32 %v464, 16
        %v485 = vrot.slane %v483, 7
        %v486 = vshll.u32 %v464, 16
        %v488 = vor.u32 %v485, %v486
        %v489 = vrot.slane %v485, 4
        %v491 = vshrl.u32 %v465, 16
        %v493 = vrot.slane %v491, 7
        %v494 = vshll.u32 %v465, 16
        %v496 = vor.u32 %v493, %v494
        %v497 = vrot.slane %v493, 4
        %s506 = scalar_lea.vmem [#allocation2], 8
        %vm507 = vcmask 60416
        %vm508 = vsmask.f32 7938
        %vm509 = vmand %vm507, %vm508
        %v510 = vld [vmem:[%s506] sm:$0xf]
        %v511 = vsel %vm509, %v472, %v510
        %512 = vst [vmem:[%s506] sm:$0xf] %v511
        %vm513 = vcmask 57344
        %vm514 = vsmask.f32 256
        %vm515 = vmand %vm513, %vm514
        %v516 = vld [vmem:[%s506 + $0x4] sm:$0x1]
        %v517 = vsel %vm515, %v473, %v516
        %518 = vst [vmem:[%s506 + $0x4] sm:$0x1] %v517
        %v519 = vld [vmem:[%s506 + $0x8] sm:$0xf]
        %v520 = vsel %vm509, %v480, %v519
        %521 = vst [vmem:[%s506 + $0x8] sm:$0xf] %v520
        %v522 = vld [vmem:[%s506 + $0xc] sm:$0x1]
        %v523 = vsel %vm515, %v481, %v522
        %524 = vst [vmem:[%s506 + $0xc] sm:$0x1] %v523
        %v525 = vld [vmem:[%s506 + $0x10] sm:$0xf]
        %v526 = vsel %vm509, %v488, %v525
        %527 = vst [vmem:[%s506 + $0x10] sm:$0xf] %v526
        %v528 = vld [vmem:[%s506 + $0x14] sm:$0x1]
        %v529 = vsel %vm515, %v489, %v528
        %530 = vst [vmem:[%s506 + $0x14] sm:$0x1] %v529
        %v531 = vld [vmem:[%s506 + $0x18] sm:$0xf]
        %v532 = vsel %vm509, %v496, %v531
        %533 = vst [vmem:[%s506 + $0x18] sm:$0xf] %v532
        %v534 = vld [vmem:[%s506 + $0x1c] sm:$0x1]
        %v535 = vsel %vm515, %v497, %v534
        %536 = vst [vmem:[%s506 + $0x1c] sm:$0x1] %v535
        %s537 = ssub.s32 %s340, 1
        %p538 = scmp.gt.s32.totalorder %s537, 0
        %s539 = scalar_select %p538, %s537, 0
        %s540 = smul.addr %s539, 4
        %s541 = scalar_lea.vmem %s305, %s540 [#allocation4]
        %v542 = vld [vmem:[%s541] sm:$0xf]
        %v543 = vunpack.c.l.bf16 %v542
        %v544 = vmul.f32 %v543, %v360
        %v545 = vadd.f32 %v544, %v370
        %v546 = vmax.f32 %v545, 0.0
        %v547 = vpack.c.bf16 %v546, %v546
        %v549 = vsel %vm394, %v547, 0
        %551 = vmatprep.subr.bf16.mxu0 0
        %552 = vmatpush1.bf16.msra.mxu0 0
        %553 = vmatprep.subr.bf16.mxu0 0
        %554 = vmatpush1.bf16.msra.mxu0 0
        %555 = vmatprep.subr.bf16.mxu0 0
        %556 = vmatpush1.bf16.msra.mxu0 0
        %557 = vmatprep.subr.bf16.mxu0 0
        %558 = vmatpush1.bf16.msra.mxu0 0
        %559 = vmatprep.subr.bf16.mxu0 0
        %560 = vmatpush1.bf16.msra.mxu0 0
        %561 = vmatprep.subr.bf16.mxu0 0
        %562 = vmatpush1.bf16.msra.mxu0 0
        %563 = vmatprep.subr.bf16.mxu0 0
        %564 = vmatpush1.bf16.msra.mxu0 0
        %565 = vmatprep.subr.bf16.mxu0 0
        %566 = vmatpush1.bf16.msra.mxu0 %v392
        %567 = vmatprep.subr.bf16.mxu0 0
        %568 = vmatpush2.bf16.msra.mxu0 0
        %569 = vmatprep.subr.bf16.mxu0 0
        %570 = vmatpush2.bf16.msra.mxu0 0
        %571 = vmatprep.subr.bf16.mxu0 0
        %572 = vmatpush2.bf16.msra.mxu0 0
        %573 = vmatprep.subr.bf16.mxu0 0
        %574 = vmatpush2.bf16.msra.mxu0 0
        %575 = vmatprep.subr.bf16.mxu0 0
        %576 = vmatpush2.bf16.msra.mxu0 0
        %577 = vmatprep.subr.bf16.mxu0 0
        %578 = vmatpush2.bf16.msra.mxu0 0
        %579 = vmatprep.subr.bf16.mxu0 0
        %580 = vmatpush2.bf16.msra.mxu0 0
        %581 = vmatprep.subr.bf16.mxu0 0
        %582 = vmatpush2.bf16.msra.mxu0 0
        %583 = vmatprep.mubr.bf16.mxu0 0
        %584 = vmatmul.mubr.bf16.gmra.mxu0 %v549
        %v585 = vpop.f32.mrf.mxu0
        %v586 = vadd.f32 %v386, %v585
        %v587 = vpop.f32.mrf.mxu0
        %v588 = vpop.f32.mrf.mxu0
        %v589 = vpop.f32.mrf.mxu0
        %590 = vdwg.mxu0
        %v591 = vmax.f32 %v586, 0.0
        %v592 = vpack.c.bf16 %v591, %v591
        %p593 = scmp.ge.s32.totalorder %s537, 0
        %s594 = scalar_select %p593, 1, 0
        %s595 = scvt.s32.f32 %s594
        %p597 = scmp.ne.f32.partialorder %s595, %s595
        %s598 = sshrl.u32 %s595, 16
        %s599 = sand.u32 %s598, 1
        %s600 = sadd.s32 32767, %s599
        %s601 = sadd.s32 %s595, %s600
        %s602 = sand.u32 %s601, 4294901760
        %s603 = scalar_select %p597, 2143289344, %s602
        %s605 = sshrl.u32 %s603, 16
        %s606 = sshll.u32 %s605, 16
        %s607 = sor.u32 %s605, %s606
        %v608 = vstv %s607
        %v610 = vmul.bf16 %v592, %v608
        %v612 = vunpack.c.l.b16 %v610
        %v613 = vpack.c.b16 %v612, %v612
        %v615 = vshrl.u32 %v613, 16
        %v617 = vrot.slane %v615, 7
        %v618 = vshll.u32 %v613, 16
        %v620 = vor.u32 %v617, %v618
        %v621 = vrot.slane %v617, 4
        %v624 = vld [vmem:[#allocation2] sm:$0xf]
        %v625 = vsel %vm509, %v620, %v624
        %626 = vst [vmem:[#allocation2] sm:$0xf] %v625
        %v627 = vld [vmem:[#allocation2 + $0x4] sm:$0x1]
        %v628 = vsel %vm515, %v621, %v627
        %629 = vst [vmem:[#allocation2 + $0x4] sm:$0x1] %v628
        %s630 = sadd.s32 %s340, 4
        %p631 = scmp.lt.s32.totalorder %s630, 7
        %s632 = scalar_select %p631, %s630, 7
        %s633 = smul.addr %s632, 4
        %s634 = scalar_lea.vmem %s305, %s633 [#allocation4]
        %v635 = vld [vmem:[%s634] sm:$0xf]
        %v636 = vunpack.c.l.bf16 %v635
        %v637 = vmul.f32 %v636, %v360
        %v638 = vadd.f32 %v637, %v370
        %v639 = vmax.f32 %v638, 0.0
        %v640 = vpack.c.bf16 %v639, %v639
        %v642 = vsel %vm394, %v640, 0
        %644 = vmatprep.subr.bf16.mxu0 0
        %645 = vmatpush1.bf16.msra.mxu0 0
        %646 = vmatprep.subr.bf16.mxu0 0
        %647 = vmatpush1.bf16.msra.mxu0 0
        %648 = vmatprep.subr.bf16.mxu0 0
        %649 = vmatpush1.bf16.msra.mxu0 0
        %650 = vmatprep.subr.bf16.mxu0 0
        %651 = vmatpush1.bf16.msra.mxu0 0
        %652 = vmatprep.subr.bf16.mxu0 0
        %653 = vmatpush1.bf16.msra.mxu0 0
        %654 = vmatprep.subr.bf16.mxu0 0
        %655 = vmatpush1.bf16.msra.mxu0 0
        %656 = vmatprep.subr.bf16.mxu0 0
        %657 = vmatpush1.bf16.msra.mxu0 0
        %658 = vmatprep.subr.bf16.mxu0 0
        %659 = vmatpush1.bf16.msra.mxu0 %v392
        %660 = vmatprep.subr.bf16.mxu0 0
        %661 = vmatpush2.bf16.msra.mxu0 0
        %662 = vmatprep.subr.bf16.mxu0 0
        %663 = vmatpush2.bf16.msra.mxu0 0
        %664 = vmatprep.subr.bf16.mxu0 0
        %665 = vmatpush2.bf16.msra.mxu0 0
        %666 = vmatprep.subr.bf16.mxu0 0
        %667 = vmatpush2.bf16.msra.mxu0 0
        %668 = vmatprep.subr.bf16.mxu0 0
        %669 = vmatpush2.bf16.msra.mxu0 0
        %670 = vmatprep.subr.bf16.mxu0 0
        %671 = vmatpush2.bf16.msra.mxu0 0
        %672 = vmatprep.subr.bf16.mxu0 0
        %673 = vmatpush2.bf16.msra.mxu0 0
        %674 = vmatprep.subr.bf16.mxu0 0
        %675 = vmatpush2.bf16.msra.mxu0 0
        %676 = vmatprep.mubr.bf16.mxu0 0
        %677 = vmatmul.mubr.bf16.gmra.mxu0 %v642
        %v678 = vpop.f32.mrf.mxu0
        %v679 = vadd.f32 %v386, %v678
        %v680 = vpop.f32.mrf.mxu0
        %v681 = vpop.f32.mrf.mxu0
        %v682 = vpop.f32.mrf.mxu0
        %683 = vdwg.mxu0
        %v684 = vmax.f32 %v679, 0.0
        %v685 = vpack.c.bf16 %v684, %v684
        %p686 = scmp.lt.s32.totalorder %s630, 8
        %s687 = scalar_select %p686, 1, 0
        %s688 = scvt.s32.f32 %s687
        %p690 = scmp.ne.f32.partialorder %s688, %s688
        %s691 = sshrl.u32 %s688, 16
        %s692 = sand.u32 %s691, 1
        %s693 = sadd.s32 32767, %s692
        %s694 = sadd.s32 %s688, %s693
        %s695 = sand.u32 %s694, 4294901760
        %s696 = scalar_select %p690, 2143289344, %s695
        %s698 = sshrl.u32 %s696, 16
        %s699 = sshll.u32 %s698, 16
        %s700 = sor.u32 %s698, %s699
        %v701 = vstv %s700
        %v703 = vmul.bf16 %v685, %v701
        %v705 = vunpack.c.l.b16 %v703
        %v706 = vpack.c.b16 %v705, %v705
        %v708 = vshrl.u32 %v706, 16
        %v710 = vrot.slane %v708, 7
        %v711 = vshll.u32 %v706, 16
        %v713 = vor.u32 %v710, %v711
        %v714 = vrot.slane %v710, 4
        %s717 = scalar_lea.vmem [#allocation2], 40
        %v718 = vld [vmem:[%s717] sm:$0xf]
        %v719 = vsel %vm509, %v713, %v718
        %720 = vst [vmem:[%s717] sm:$0xf] %v719
        %v721 = vld [vmem:[%s717 + $0x4] sm:$0x1]
        %v722 = vsel %vm515, %v714, %v721
        %723 = vst [vmem:[%s717 + $0x4] sm:$0x1] %v722
        %v724 = vld [vmem:[#allocation2] sm:$0x1]
        %v725 = vsel %vm515, 0, %v724
        %726 = vst [vmem:[#allocation2] sm:$0x1] %v725
        %v727 = vld [vmem:[#allocation2 + $0x8] sm:$0x1]
        %v728 = vsel %vm515, 0, %v727
        %729 = vst [vmem:[#allocation2 + $0x8] sm:$0x1] %v728
        %v730 = vld [vmem:[#allocation2 + $0x10] sm:$0x1]
        %v731 = vsel %vm515, 0, %v730
        %732 = vst [vmem:[#allocation2 + $0x10] sm:$0x1] %v731
        %v733 = vld [vmem:[#allocation2 + $0x18] sm:$0x1]
        %v734 = vsel %vm515, 0, %v733
        %735 = vst [vmem:[#allocation2 + $0x18] sm:$0x1] %v734
        %v736 = vld [vmem:[#allocation2 + $0x20] sm:$0x1]
        %v737 = vsel %vm515, 0, %v736
        %738 = vst [vmem:[#allocation2 + $0x20] sm:$0x1] %v737
        %v739 = vld [vmem:[#allocation2 + $0x28] sm:$0x1]
        %v740 = vsel %vm515, 0, %v739
        %741 = vst [vmem:[#allocation2 + $0x28] sm:$0x1] %v740
        %vm742 = vmand %vm513, %vm508
        %v743 = vld [vmem:[#allocation2 + $0x4] sm:$0x1]
        %v744 = vsel %vm742, 0, %v743
        %745 = vst [vmem:[#allocation2 + $0x4] sm:$0x1] %v744
        %v746 = vld [vmem:[#allocation2 + $0xc] sm:$0x1]
        %v747 = vsel %vm742, 0, %v746
        %748 = vst [vmem:[#allocation2 + $0xc] sm:$0x1] %v747
        %v749 = vld [vmem:[#allocation2 + $0x14] sm:$0x1]
        %v750 = vsel %vm742, 0, %v749
        %751 = vst [vmem:[#allocation2 + $0x14] sm:$0x1] %v750
        %v752 = vld [vmem:[#allocation2 + $0x1c] sm:$0x1]
        %v753 = vsel %vm742, 0, %v752
        %754 = vst [vmem:[#allocation2 + $0x1c] sm:$0x1] %v753
        %v755 = vld [vmem:[#allocation2 + $0x24] sm:$0x1]
        %v756 = vsel %vm742, 0, %v755
        %757 = vst [vmem:[#allocation2 + $0x24] sm:$0x1] %v756
        %v758 = vld [vmem:[#allocation2 + $0x2c] sm:$0x1]
        %v759 = vsel %vm742, 0, %v758
        %760 = vst [vmem:[#allocation2 + $0x2c] sm:$0x1] %v759
        %v761 = vld [vmem:[#allocation2] sm:$0xf]
        %v762 = vld [vmem:[#allocation2 + $0x8] sm:$0xf]
        %v763 = vld [vmem:[#allocation2 + $0x10] sm:$0xf]
        %v764 = vld [vmem:[#allocation2 + $0x18] sm:$0xf]
        %vm765 = vcmask 60416
        %766 = vst.msk [vmem:[#allocation3] sm:$0xf] %vm765, %v761
        %767 = vst.msk [vmem:[#allocation3 + $0x4] sm:$0xf] %vm765, %v762
        %768 = vst.msk [vmem:[#allocation3 + $0x8] sm:$0xf] %vm765, %v763
        %769 = vst.msk [vmem:[#allocation3 + $0xc] sm:$0xf] %vm765, %v764
        %v770 = vld [vmem:[#allocation2] sm:$0xf]
        %v771 = vld [vmem:[#allocation2 + $0x4] sm:$0x1]
        %v772 = vld [vmem:[#allocation2 + $0x8] sm:$0xf]
        %v773 = vld [vmem:[#allocation2 + $0xc] sm:$0x1]
        %v774 = vld [vmem:[#allocation2 + $0x10] sm:$0xf]
        %v775 = vld [vmem:[#allocation2 + $0x14] sm:$0x1]
        %v776 = vld [vmem:[#allocation2 + $0x18] sm:$0xf]
        %v777 = vld [vmem:[#allocation2 + $0x1c] sm:$0x1]
        %vm778 = vsmask.f32 3328
        %vm779 = vsmask.f32 7440
        %vm780 = vmor %vm778, %vm779
        %v782 = vshrl.u32 %v770, 16
        %v784 = vrot.slane %v782, 4
        %v785 = vshll.u32 %v770, 16
        %v787 = vrot.slane %v785, 5
        %v788 = vor.u32 %v784, %v787
        %v789 = vrot.slane %v788, 4
        %v791 = vshll.u32 %v771, 16
        %v793 = vrot.slane %v791, 5
        %v794 = vsel %vm780, %v789, %v793
        %v796 = vshrl.u32 %v772, 16
        %v798 = vrot.slane %v796, 4
        %v799 = vshll.u32 %v772, 16
        %v801 = vrot.slane %v799, 5
        %v802 = vor.u32 %v798, %v801
        %v803 = vrot.slane %v802, 4
        %v805 = vshll.u32 %v773, 16
        %v807 = vrot.slane %v805, 5
        %v808 = vsel %vm780, %v803, %v807
        %v810 = vshrl.u32 %v774, 16
        %v812 = vrot.slane %v810, 4
        %v813 = vshll.u32 %v774, 16
        %v815 = vrot.slane %v813, 5
        %v816 = vor.u32 %v812, %v815
        %v817 = vrot.slane %v816, 4
        %v819 = vshll.u32 %v775, 16
        %v821 = vrot.slane %v819, 5
        %v822 = vsel %vm780, %v817, %v821
        %v824 = vshrl.u32 %v776, 16
        %v826 = vrot.slane %v824, 4
        %v827 = vshll.u32 %v776, 16
        %v829 = vrot.slane %v827, 5
        %v830 = vor.u32 %v826, %v829
        %v831 = vrot.slane %v830, 4
        %v833 = vshll.u32 %v777, 16
        %v835 = vrot.slane %v833, 5
        %v836 = vsel %vm780, %v831, %v835
        %837 = vrot.lane.b32.xlu0 %v794, 8
        %v838 = vpop.permute.xlu0 %837
        %839 = vrot.lane.b32.xlu0 %v808, 8
        %v840 = vpop.permute.xlu0 %839
        %841 = vrot.lane.b32.xlu0 %v822, 8
        %v842 = vpop.permute.xlu0 %841
        %843 = vrot.lane.b32.xlu0 %v836, 8
        %v844 = vpop.permute.xlu0 %843
        %vm849 = vcmask 126016
        %850 = vst.msk [vmem:[#allocation3] sm:$0xf] %vm849, %v838
        %851 = vst.msk [vmem:[#allocation3 + $0x4] sm:$0xf] %vm849, %v840
        %852 = vst.msk [vmem:[#allocation3 + $0x8] sm:$0xf] %vm849, %v842
        %853 = vst.msk [vmem:[#allocation3 + $0xc] sm:$0xf] %vm849, %v844
        %v854 = vld [vmem:[#allocation2] sm:$0xe]
        %v855 = vld [vmem:[#allocation2 + $0x4] sm:$0x1]
        %v856 = vld [vmem:[#allocation2 + $0x8] sm:$0xe]
        %v857 = vld [vmem:[#allocation2 + $0xc] sm:$0x1]
        %v858 = vld [vmem:[#allocation2 + $0x10] sm:$0xe]
        %v859 = vld [vmem:[#allocation2 + $0x14] sm:$0x1]
        %v860 = vld [vmem:[#allocation2 + $0x18] sm:$0xe]
        %v861 = vld [vmem:[#allocation2 + $0x1c] sm:$0x1]
        %vm870 = vcmask 1042432
        %vm871 = vcmask 1046532
        %vm872 = vmor %vm870, %vm871
        %v873 = vrot.slane %v854, 5
        %v874 = vrot.slane %v873, 4
        %v875 = vrot.slane %v855, 5
        %v876 = vsel %vm872, %v874, %v875
        %v877 = vrot.slane %v856, 5
        %v878 = vrot.slane %v877, 4
        %v879 = vrot.slane %v857, 5
        %v880 = vsel %vm872, %v878, %v879
        %v881 = vrot.slane %v858, 5
        %v882 = vrot.slane %v881, 4
        %v883 = vrot.slane %v859, 5
        %v884 = vsel %vm872, %v882, %v883
        %v885 = vrot.slane %v860, 5
        %v886 = vrot.slane %v885, 4
        %v887 = vrot.slane %v861, 5
        %v888 = vsel %vm872, %v886, %v887
        %889 = vrot.lane.b32.xlu0 %v876, 16
        %v890 = vpop.permute.xlu0 %889
        %891 = vrot.lane.b32.xlu0 %v880, 16
        %v892 = vpop.permute.xlu0 %891
        %893 = vrot.lane.b32.xlu0 %v884, 16
        %v894 = vpop.permute.xlu0 %893
        %895 = vrot.lane.b32.xlu0 %v888, 16
        %v896 = vpop.permute.xlu0 %895
        %vm901 = vcmask 191616
        %902 = vst.msk [vmem:[#allocation3] sm:$0xf] %vm901, %v890
        %903 = vst.msk [vmem:[#allocation3 + $0x4] sm:$0xf] %vm901, %v892
        %904 = vst.msk [vmem:[#allocation3 + $0x8] sm:$0xf] %vm901, %v894
        %905 = vst.msk [vmem:[#allocation3 + $0xc] sm:$0xf] %vm901, %v896
        %v906 = vld [vmem:[%s506] sm:$0xf]
        %v907 = vld [vmem:[%s506 + $0x8] sm:$0xf]
        %v908 = vld [vmem:[%s506 + $0x10] sm:$0xf]
        %v909 = vld [vmem:[%s506 + $0x18] sm:$0xf]
        %914 = vrot.lane.b32.xlu0 %v906, 24
        %v915 = vpop.permute.xlu0 %914
        %916 = vrot.lane.b32.xlu0 %v907, 24
        %v917 = vpop.permute.xlu0 %916
        %918 = vrot.lane.b32.xlu0 %v908, 24
        %v919 = vpop.permute.xlu0 %918
        %920 = vrot.lane.b32.xlu0 %v909, 24
        %v921 = vpop.permute.xlu0 %920
        %vm926 = vcmask 257216
        %927 = vst.msk [vmem:[#allocation3] sm:$0xf] %vm926, %v915
        %928 = vst.msk [vmem:[#allocation3 + $0x4] sm:$0xf] %vm926, %v917
        %929 = vst.msk [vmem:[#allocation3 + $0x8] sm:$0xf] %vm926, %v919
        %930 = vst.msk [vmem:[#allocation3 + $0xc] sm:$0xf] %vm926, %v921
        %v931 = vld [vmem:[%s506] sm:$0xf]
        %v932 = vld [vmem:[%s506 + $0x4] sm:$0x1]
        %v933 = vld [vmem:[%s506 + $0x8] sm:$0xf]
        %v934 = vld [vmem:[%s506 + $0xc] sm:$0x1]
        %v935 = vld [vmem:[%s506 + $0x10] sm:$0xf]
        %v936 = vld [vmem:[%s506 + $0x14] sm:$0x1]
        %v937 = vld [vmem:[%s506 + $0x18] sm:$0xf]
        %v938 = vld [vmem:[%s506 + $0x1c] sm:$0x1]
        %v940 = vshrl.u32 %v931, 16
        %v942 = vrot.slane %v940, 4
        %v943 = vshll.u32 %v931, 16
        %v945 = vrot.slane %v943, 5
        %v946 = vor.u32 %v942, %v945
        %v947 = vrot.slane %v946, 4
        %v949 = vshll.u32 %v932, 16
        %v951 = vrot.slane %v949, 5
        %v952 = vsel %vm780, %v947, %v951
        %v954 = vshrl.u32 %v933, 16
        %v956 = vrot.slane %v954, 4
        %v957 = vshll.u32 %v933, 16
        %v959 = vrot.slane %v957, 5
        %v960 = vor.u32 %v956, %v959
        %v961 = vrot.slane %v960, 4
        %v963 = vshll.u32 %v934, 16
        %v965 = vrot.slane %v963, 5
        %v966 = vsel %vm780, %v961, %v965
        %v968 = vshrl.u32 %v935, 16
        %v970 = vrot.slane %v968, 4
        %v971 = vshll.u32 %v935, 16
        %v973 = vrot.slane %v971, 5
        %v974 = vor.u32 %v970, %v973
        %v975 = vrot.slane %v974, 4
        %v977 = vshll.u32 %v936, 16
        %v979 = vrot.slane %v977, 5
        %v980 = vsel %vm780, %v975, %v979
        %v982 = vshrl.u32 %v937, 16
        %v984 = vrot.slane %v982, 4
        %v985 = vshll.u32 %v937, 16
        %v987 = vrot.slane %v985, 5
        %v988 = vor.u32 %v984, %v987
        %v989 = vrot.slane %v988, 4
        %v991 = vshll.u32 %v938, 16
        %v993 = vrot.slane %v991, 5
        %v994 = vsel %vm780, %v989, %v993
        %995 = vrot.lane.b32.xlu0 %v952, 32
        %v996 = vpop.permute.xlu0 %995
        %997 = vrot.lane.b32.xlu0 %v966, 32
        %v998 = vpop.permute.xlu0 %997
        %999 = vrot.lane.b32.xlu0 %v980, 32
        %v1000 = vpop.permute.xlu0 %999
        %1001 = vrot.lane.b32.xlu0 %v994, 32
        %v1002 = vpop.permute.xlu0 %1001
        %vm1007 = vcmask 322816
        %1008 = vst.msk [vmem:[#allocation3] sm:$0xf] %vm1007, %v996
        %1009 = vst.msk [vmem:[#allocation3 + $0x4] sm:$0xf] %vm1007, %v998
        %1010 = vst.msk [vmem:[#allocation3 + $0x8] sm:$0xf] %vm1007, %v1000
        %1011 = vst.msk [vmem:[#allocation3 + $0xc] sm:$0xf] %vm1007, %v1002
        %v1012 = vld [vmem:[%s506] sm:$0xe]
        %v1013 = vld [vmem:[%s506 + $0x4] sm:$0x1]
        %v1014 = vld [vmem:[%s506 + $0x8] sm:$0xe]
        %v1015 = vld [vmem:[%s506 + $0xc] sm:$0x1]
        %v1016 = vld [vmem:[%s506 + $0x10] sm:$0xe]
        %v1017 = vld [vmem:[%s506 + $0x14] sm:$0x1]
        %v1018 = vld [vmem:[%s506 + $0x18] sm:$0xe]
        %v1019 = vld [vmem:[%s506 + $0x1c] sm:$0x1]
        %v1028 = vrot.slane %v1012, 5
        %v1029 = vrot.slane %v1028, 4
        %v1030 = vrot.slane %v1013, 5
        %v1031 = vsel %vm872, %v1029, %v1030
        %v1032 = vrot.slane %v1014, 5
        %v1033 = vrot.slane %v1032, 4
        %v1034 = vrot.slane %v1015, 5
        %v1035 = vsel %vm872, %v1033, %v1034
        %v1036 = vrot.slane %v1016, 5
        %v1037 = vrot.slane %v1036, 4
        %v1038 = vrot.slane %v1017, 5
        %v1039 = vsel %vm872, %v1037, %v1038
        %v1040 = vrot.slane %v1018, 5
        %v1041 = vrot.slane %v1040, 4
        %v1042 = vrot.slane %v1019, 5
        %v1043 = vsel %vm872, %v1041, %v1042
        %1044 = vrot.lane.b32.xlu0 %v1031, 40
        %v1045 = vpop.permute.xlu0 %1044
        %1046 = vrot.lane.b32.xlu0 %v1035, 40
        %v1047 = vpop.permute.xlu0 %1046
        %1048 = vrot.lane.b32.xlu0 %v1039, 40
        %v1049 = vpop.permute.xlu0 %1048
        %1050 = vrot.lane.b32.xlu0 %v1043, 40
        %v1051 = vpop.permute.xlu0 %1050
        %vm1056 = vcmask 388416
        %1057 = vst.msk [vmem:[#allocation3] sm:$0xf] %vm1056, %v1045
        %1058 = vst.msk [vmem:[#allocation3 + $0x4] sm:$0xf] %vm1056, %v1047
        %1059 = vst.msk [vmem:[#allocation3 + $0x8] sm:$0xf] %vm1056, %v1049
        %1060 = vst.msk [vmem:[#allocation3 + $0xc] sm:$0xf] %vm1056, %v1051
        %s1061 = scalar_lea.vmem [#allocation2], 16
        %v1062 = vld [vmem:[%s1061] sm:$0xf]
        %v1063 = vld [vmem:[%s1061 + $0x8] sm:$0xf]
        %v1064 = vld [vmem:[%s1061 + $0x10] sm:$0xf]
        %v1065 = vld [vmem:[%s1061 + $0x18] sm:$0xf]
        %1070 = vrot.lane.b32.xlu0 %v1062, 48
        %v1071 = vpop.permute.xlu0 %1070
        %1072 = vrot.lane.b32.xlu0 %v1063, 48
        %v1073 = vpop.permute.xlu0 %1072
        %1074 = vrot.lane.b32.xlu0 %v1064, 48
        %v1075 = vpop.permute.xlu0 %1074
        %1076 = vrot.lane.b32.xlu0 %v1065, 48
        %v1077 = vpop.permute.xlu0 %1076
        %vm1082 = vcmask 454016
        %1083 = vst.msk [vmem:[#allocation3] sm:$0xf] %vm1082, %v1071
        %1084 = vst.msk [vmem:[#allocation3 + $0x4] sm:$0xf] %vm1082, %v1073
        %1085 = vst.msk [vmem:[#allocation3 + $0x8] sm:$0xf] %vm1082, %v1075
        %1086 = vst.msk [vmem:[#allocation3 + $0xc] sm:$0xf] %vm1082, %v1077
        %v1087 = vld [vmem:[%s1061] sm:$0xf]
        %v1088 = vld [vmem:[%s1061 + $0x4] sm:$0x1]
        %v1089 = vld [vmem:[%s1061 + $0x8] sm:$0xf]
        %v1090 = vld [vmem:[%s1061 + $0xc] sm:$0x1]
        %v1091 = vld [vmem:[%s1061 + $0x10] sm:$0xf]
        %v1092 = vld [vmem:[%s1061 + $0x14] sm:$0x1]
        %v1093 = vld [vmem:[%s1061 + $0x18] sm:$0xf]
        %v1094 = vld [vmem:[%s1061 + $0x1c] sm:$0x1]
        %v1096 = vshrl.u32 %v1087, 16
        %v1098 = vrot.slane %v1096, 4
        %v1099 = vshll.u32 %v1087, 16
        %v1101 = vrot.slane %v1099, 5
        %v1102 = vor.u32 %v1098, %v1101
        %v1103 = vrot.slane %v1102, 4
        %v1105 = vshll.u32 %v1088, 16
        %v1107 = vrot.slane %v1105, 5
        %v1108 = vsel %vm780, %v1103, %v1107
        %v1110 = vshrl.u32 %v1089, 16
        %v1112 = vrot.slane %v1110, 4
        %v1113 = vshll.u32 %v1089, 16
        %v1115 = vrot.slane %v1113, 5
        %v1116 = vor.u32 %v1112, %v1115
        %v1117 = vrot.slane %v1116, 4
        %v1119 = vshll.u32 %v1090, 16
        %v1121 = vrot.slane %v1119, 5
        %v1122 = vsel %vm780, %v1117, %v1121
        %v1124 = vshrl.u32 %v1091, 16
        %v1126 = vrot.slane %v1124, 4
        %v1127 = vshll.u32 %v1091, 16
        %v1129 = vrot.slane %v1127, 5
        %v1130 = vor.u32 %v1126, %v1129
        %v1131 = vrot.slane %v1130, 4
        %v1133 = vshll.u32 %v1092, 16
        %v1135 = vrot.slane %v1133, 5
        %v1136 = vsel %vm780, %v1131, %v1135
        %v1138 = vshrl.u32 %v1093, 16
        %v1140 = vrot.slane %v1138, 4
        %v1141 = vshll.u32 %v1093, 16
        %v1143 = vrot.slane %v1141, 5
        %v1144 = vor.u32 %v1140, %v1143
        %v1145 = vrot.slane %v1144, 4
        %v1147 = vshll.u32 %v1094, 16
        %v1149 = vrot.slane %v1147, 5
        %v1150 = vsel %vm780, %v1145, %v1149
        %1151 = vrot.lane.b32.xlu0 %v1108, 56
        %v1152 = vpop.permute.xlu0 %1151
        %1153 = vrot.lane.b32.xlu0 %v1122, 56
        %v1154 = vpop.permute.xlu0 %1153
        %1155 = vrot.lane.b32.xlu0 %v1136, 56
        %v1156 = vpop.permute.xlu0 %1155
        %1157 = vrot.lane.b32.xlu0 %v1150, 56
        %v1158 = vpop.permute.xlu0 %1157
        %vm1163 = vcmask 519616
        %1164 = vst.msk [vmem:[#allocation3] sm:$0xf] %vm1163, %v1152
        %1165 = vst.msk [vmem:[#allocation3 + $0x4] sm:$0xf] %vm1163, %v1154
        %1166 = vst.msk [vmem:[#allocation3 + $0x8] sm:$0xf] %vm1163, %v1156
        %1167 = vst.msk [vmem:[#allocation3 + $0xc] sm:$0xf] %vm1163, %v1158
        %v1168 = vld [vmem:[%s1061] sm:$0xe]
        %v1169 = vld [vmem:[%s1061 + $0x4] sm:$0x1]
        %v1170 = vld [vmem:[%s1061 + $0x8] sm:$0xe]
        %v1171 = vld [vmem:[%s1061 + $0xc] sm:$0x1]
        %v1172 = vld [vmem:[%s1061 + $0x10] sm:$0xe]
        %v1173 = vld [vmem:[%s1061 + $0x14] sm:$0x1]
        %v1174 = vld [vmem:[%s1061 + $0x18] sm:$0xe]
        %v1175 = vld [vmem:[%s1061 + $0x1c] sm:$0x1]
        %v1184 = vrot.slane %v1168, 5
        %v1185 = vrot.slane %v1184, 4
        %v1186 = vrot.slane %v1169, 5
        %v1187 = vsel %vm872, %v1185, %v1186
        %v1188 = vrot.slane %v1170, 5
        %v1189 = vrot.slane %v1188, 4
        %v1190 = vrot.slane %v1171, 5
        %v1191 = vsel %vm872, %v1189, %v1190
        %v1192 = vrot.slane %v1172, 5
        %v1193 = vrot.slane %v1192, 4
        %v1194 = vrot.slane %v1173, 5
        %v1195 = vsel %vm872, %v1193, %v1194
        %v1196 = vrot.slane %v1174, 5
        %v1197 = vrot.slane %v1196, 4
        %v1198 = vrot.slane %v1175, 5
        %v1199 = vsel %vm872, %v1197, %v1198
        %1200 = vrot.lane.b32.xlu0 %v1187, 64
        %v1201 = vpop.permute.xlu0 %1200
        %1202 = vrot.lane.b32.xlu0 %v1191, 64
        %v1203 = vpop.permute.xlu0 %1202
        %1204 = vrot.lane.b32.xlu0 %v1195, 64
        %v1205 = vpop.permute.xlu0 %1204
        %1206 = vrot.lane.b32.xlu0 %v1199, 64
        %v1207 = vpop.permute.xlu0 %1206
        %vm1212 = vcmask 585216
        %1213 = vst.msk [vmem:[#allocation3] sm:$0xf] %vm1212, %v1201
        %1214 = vst.msk [vmem:[#allocation3 + $0x4] sm:$0xf] %vm1212, %v1203
        %1215 = vst.msk [vmem:[#allocation3 + $0x8] sm:$0xf] %vm1212, %v1205
        %1216 = vst.msk [vmem:[#allocation3 + $0xc] sm:$0xf] %vm1212, %v1207
        %v1217 = vld [vmem:[#allocation3] sm:$0xf]
        %v1218 = vld [vmem:[#allocation3 + $0x4] sm:$0xf]
        %v1219 = vld [vmem:[#allocation3 + $0x8] sm:$0xf]
        %v1220 = vld [vmem:[#allocation3 + $0xc] sm:$0xf]
        %v1221 = vld [vmem:[%s5] sm:$0xf]
        %v1222 = vld [vmem:[%s5 + $0x4] sm:$0xf]
        %v1223 = vld [vmem:[%s5 + $0x8] sm:$0xf]
        %v1224 = vld [vmem:[%s5 + $0xc] sm:$0xf]
        %v1225 = vld [vmem:[%s5 + $0x10] sm:$0xf]
        %v1226 = vld [vmem:[%s5 + $0x14] sm:$0xf]
        %v1227 = vld [vmem:[%s5 + $0x18] sm:$0xf]
        %v1228 = vld [vmem:[%s5 + $0x1c] sm:$0xf]
        %v1229 = vld [vmem:[%s5 + $0x20] sm:$0xf]
        %v1230 = vld [vmem:[%s6] sm:$0x1]
        %v1232 = vlaneseq
        %v1233 = vshrl.u32 %v1232, 7
        %v1234 = vsub.s32 0, %v1233
        %v1235 = vrot.slane %v1230, %v1234
        %v1241 = vunpack.c.l.b16 %v1217
        %v1242 = vunpack.c.l.b16 %v1218
        %v1243 = vunpack.c.l.b16 %v1219
        %v1244 = vunpack.c.l.b16 %v1220
        %v1245 = vpack.c.b16 %v1242, %v1241
        %v1246 = vpack.c.b16 %v1244, %v1243
        %v1256 = vunpack.c.l.b16 %v1221
        %v1257 = vunpack.c.l.b16 %v1222
        %v1258 = vunpack.c.l.b16 %v1223
        %v1259 = vunpack.c.l.b16 %v1224
        %v1260 = vunpack.c.l.b16 %v1225
        %v1261 = vunpack.c.l.b16 %v1226
        %v1262 = vunpack.c.l.b16 %v1227
        %v1263 = vunpack.c.l.b16 %v1228
        %v1264 = vunpack.c.l.b16 %v1229
        %v1265 = vpack.c.b16 %v1257, %v1256
        %v1266 = vpack.c.b16 %v1259, %v1258
        %v1267 = vpack.c.b16 %v1261, %v1260
        %v1268 = vpack.c.b16 %v1263, %v1262
        %v1269 = vpack.c.b16 %v1264, %v1264
        %vm1274 = vcmask 588800
        %v1276 = vsel %vm1274, %v1245, 0
        %v1279 = vsel %vm1274, %v1246, 0
        %vm1281 = vcmask 1043456
        %v1283 = vsel %vm1281, %v1269, 0
        %1285 = vmatprep.subr.bf16.mxu0 0
        %1286 = vmatpush1.bf16.msra.mxu0 0
        %1287 = vmatprep.subr.bf16.mxu0 0
        %1288 = vmatpush1.bf16.msra.mxu0 0
        %1289 = vmatprep.subr.bf16.mxu0 0
        %1290 = vmatpush1.bf16.msra.mxu0 0
        %1291 = vmatprep.subr.bf16.mxu0 0
        %1292 = vmatpush1.bf16.msra.mxu0 %v1283
        %1293 = vmatprep.subr.bf16.mxu0 0
        %1294 = vmatpush1.bf16.msra.mxu0 %v1268
        %1295 = vmatprep.subr.bf16.mxu0 0
        %1296 = vmatpush1.bf16.msra.mxu0 %v1267
        %1297 = vmatprep.subr.bf16.mxu0 0
        %1298 = vmatpush1.bf16.msra.mxu0 %v1266
        %1299 = vmatprep.subr.bf16.mxu0 0
        %1300 = vmatpush1.bf16.msra.mxu0 %v1265
        %1301 = vmatprep.subr.bf16.mxu0 0
        %1302 = vmatpush2.bf16.msra.mxu0 0
        %1303 = vmatprep.subr.bf16.mxu0 0
        %1304 = vmatpush2.bf16.msra.mxu0 0
        %1305 = vmatprep.subr.bf16.mxu0 0
        %1306 = vmatpush2.bf16.msra.mxu0 0
        %1307 = vmatprep.subr.bf16.mxu0 0
        %1308 = vmatpush2.bf16.msra.mxu0 0
        %1309 = vmatprep.subr.bf16.mxu0 0
        %1310 = vmatpush2.bf16.msra.mxu0 0
        %1311 = vmatprep.subr.bf16.mxu0 0
        %1312 = vmatpush2.bf16.msra.mxu0 0
        %1313 = vmatprep.subr.bf16.mxu0 0
        %1314 = vmatpush2.bf16.msra.mxu0 0
        %1315 = vmatprep.subr.bf16.mxu0 0
        %1316 = vmatpush2.bf16.msra.mxu0 0
        %1317 = vmatprep.mubr.bf16.mxu0 0
        %1318 = vmatmul.mubr.bf16.gmra.mxu0 %v1276
        %v1319 = vpop.f32.mrf.mxu0
        %v1320 = vadd.f32 %v1235, %v1319
        %v1321 = vpop.f32.mrf.mxu0
        %v1322 = vpop.f32.mrf.mxu0
        %v1323 = vadd.f32 %v1235, %v1322
        %v1324 = vpop.f32.mrf.mxu0
        %1325 = vmatprep.mubr.bf16.mxu0 0
        %1326 = vmatmul.mubr.bf16.gmra.mxu0 %v1279
        %v1327 = vpop.f32.mrf.mxu0
        %v1328 = vadd.f32 %v1235, %v1327
        %v1329 = vpop.f32.mrf.mxu0
        %v1330 = vpop.f32.mrf.mxu0
        %v1331 = vadd.f32 %v1235, %v1330
        %v1332 = vpop.f32.mrf.mxu0
        %1333 = vdwg.mxu0
        %v1334 = vmax.f32 %v1320, 0.0
        %v1335 = vmax.f32 %v1323, 0.0
        %v1336 = vmax.f32 %v1328, 0.0
        %v1337 = vmax.f32 %v1331, 0.0
        %v1338 = vpack.c.bf16 %v1335, %v1334
        %v1339 = vpack.c.bf16 %v1337, %v1336
        %v1340 = vld [vmem:[%s347] sm:$0xf]
        %v1341 = vld [vmem:[%s347 + $0x4] sm:$0xf]
        %v1342 = vld [vmem:[%s347 + $0x8] sm:$0xf]
        %v1343 = vld [vmem:[%s347 + $0xc] sm:$0xf]
        %v1344 = vunpack.c.l.bf16 %v1340
        %v1345 = vunpack.c.l.bf16 %v1341
        %v1346 = vunpack.c.l.bf16 %v1342
        %v1347 = vunpack.c.l.bf16 %v1343
        %v1348 = vmul.f32 %v1344, %v360
        %v1349 = vmul.f32 %v1345, %v360
        %v1350 = vmul.f32 %v1346, %v360
        %v1351 = vmul.f32 %v1347, %v360
        %v1352 = vadd.f32 %v1348, %v370
        %v1353 = vadd.f32 %v1349, %v370
        %v1354 = vadd.f32 %v1350, %v370
        %v1355 = vadd.f32 %v1351, %v370
        %v1356 = vmax.f32 %v1352, 0.0
        %v1357 = vmax.f32 %v1353, 0.0
        %v1358 = vmax.f32 %v1354, 0.0
        %v1359 = vmax.f32 %v1355, 0.0
        %v1360 = vpack.c.bf16 %v1357, %v1356
        %v1361 = vpack.c.bf16 %v1359, %v1358
        %1364 = vrot.lane.b32.xlu0 %v1360, 8
        %v1365 = vpop.permute.xlu0 %1364
        %1366 = vrot.lane.b32.xlu0 %v1361, 8
        %v1367 = vpop.permute.xlu0 %1366
        %vm1368 = vcmask 64512
        %v1371 = vsel %vm1368, %v1338, %v1365
        %v1374 = vsel %vm1368, %v1339, %v1367
        %v1375 = vld [vmem:[%s7] sm:$0xf]
        %v1376 = vld [vmem:[%s7 + $0x4] sm:$0xf]
        %v1377 = vld [vmem:[%s7 + $0x8] sm:$0xf]
        %v1381 = vunpack.c.l.b16 %v1375
        %v1382 = vunpack.c.l.b16 %v1376
        %v1383 = vunpack.c.l.b16 %v1377
        %v1384 = vpack.c.b16 %v1382, %v1381
        %v1385 = vpack.c.b16 %v1383, %v1383
        %vm1387 = vcmask 195584
        %v1388 = vsel %vm1387, %v1371, 0
        %v1390 = vsel %vm1387, %v1374, 0
        %v1393 = vsel %vm1281, %v1385, 0
        %1395 = vmatprep.subr.bf16.mxu0 0
        %1396 = vmatpush1.bf16.msra.mxu0 0
        %1397 = vmatprep.subr.bf16.mxu0 0
        %1398 = vmatpush1.bf16.msra.mxu0 0
        %1399 = vmatprep.subr.bf16.mxu0 0
        %1400 = vmatpush1.bf16.msra.mxu0 0
        %1401 = vmatprep.subr.bf16.mxu0 0
        %1402 = vmatpush1.bf16.msra.mxu0 0
        %1403 = vmatprep.subr.bf16.mxu0 0
        %1404 = vmatpush1.bf16.msra.mxu0 0
        %1405 = vmatprep.subr.bf16.mxu0 0
        %1406 = vmatpush1.bf16.msra.mxu0 0
        %1407 = vmatprep.subr.bf16.mxu0 0
        %1408 = vmatpush1.bf16.msra.mxu0 %v1393
        %1409 = vmatprep.subr.bf16.mxu0 0
        %1410 = vmatpush1.bf16.msra.mxu0 %v1384
        %1411 = vmatprep.subr.bf16.mxu0 0
        %1412 = vmatpush2.bf16.msra.mxu0 0
        %1413 = vmatprep.subr.bf16.mxu0 0
        %1414 = vmatpush2.bf16.msra.mxu0 0
        %1415 = vmatprep.subr.bf16.mxu0 0
        %1416 = vmatpush2.bf16.msra.mxu0 0
        %1417 = vmatprep.subr.bf16.mxu0 0
        %1418 = vmatpush2.bf16.msra.mxu0 0
        %1419 = vmatprep.subr.bf16.mxu0 0
        %1420 = vmatpush2.bf16.msra.mxu0 0
        %1421 = vmatprep.subr.bf16.mxu0 0
        %1422 = vmatpush2.bf16.msra.mxu0 0
        %1423 = vmatprep.subr.bf16.mxu0 0
        %1424 = vmatpush2.bf16.msra.mxu0 0
        %1425 = vmatprep.subr.bf16.mxu0 0
        %1426 = vmatpush2.bf16.msra.mxu0 0
        %1427 = vmatprep.mubr.bf16.mxu0 0
        %1428 = vmatmul.mubr.bf16.gmra.mxu0 %v1388
        %v1429 = vpop.f32.mrf.mxu0
        %v1430 = vadd.f32 0.0, %v1429
        %v1431 = vpop.f32.mrf.mxu0
        %v1432 = vpop.f32.mrf.mxu0
        %v1433 = vadd.f32 0.0, %v1432
        %v1434 = vpop.f32.mrf.mxu0
        %1435 = vmatprep.mubr.bf16.mxu0 0
        %1436 = vmatmul.mubr.bf16.gmra.mxu0 %v1390
        %v1437 = vpop.f32.mrf.mxu0
        %v1438 = vadd.f32 0.0, %v1437
        %v1439 = vpop.f32.mrf.mxu0
        %v1440 = vpop.f32.mrf.mxu0
        %v1441 = vadd.f32 0.0, %v1440
        %v1442 = vpop.f32.mrf.mxu0
        %1443 = vdwg.mxu0
        %v1444 = vpack.c.bf16 %v1430, %v1430
        %v1445 = vpack.c.bf16 %v1433, %v1433
        %v1446 = vpack.c.bf16 %v1438, %v1438
        %v1447 = vpack.c.bf16 %v1441, %v1441
        %vm1448 = vcmask 257024
        %1449 = vst.msk [vmem:[%s337] sm:$0xf] %vm1448, %v1444
        %1450 = vst.msk [vmem:[%s337 + $0x4] sm:$0xf] %vm1448, %v1445
        %1451 = vst.msk [vmem:[%s337 + $0x8] sm:$0xf] %vm1448, %v1446
        %1452 = vst.msk [vmem:[%s337 + $0xc] sm:$0xf] %vm1448, %v1447
        %s1453 = sand.u32 %s220, 1
        %s1454 = scalar_lea.sflag [#allocation6], %s1453
        %s1455 = sand.u32 %s220, 1
        %s1456 = smul.addr %s1455, 16
        %s1457 = scalar_lea.vmem [#allocation7], %s1456
        // Predicated region
        $region57: #{tpu_custom_call.1} parent=51 // pred_check
          %p1458 = pneg %p230
        $region58: #{tpu_custom_call.1} parent=51 // pred_check_branch
          %1460 = sbr.rel (%p1458) target = $region60
        $region59: #{tpu_custom_call.1} parent=51 // pred_region
          %s1461 = smul.u32 4, %s30
          %s1463 = ssub.s32 256, 256
          %1464 = vsyncadd %s1454, %s1463
          %s1465 = smul.addr %s29, 8
          %s1466 = sadd.s32 %s1461, %s1465
          %s1467 = smul.addr %s1466, 64
          %s1468 = scalar_lea.hbm %s8, %s1467
          %s1469 = sshll.u32 %s1457, 4
          %s1470 = int_to_ptr.vmem [resolvable:$true] %s1469
          %1475 = dma.vmem_to_hbm [thread:$0]  %s1470, 256, %s1468, %s1454, 64, 64, 4
        $region60: #{tpu_custom_call.1} parent=51 // pred_fallthru
          _
      $region52: #{tpu_custom_call.1} parent=5 // pred_fallthru
        _
      %p1476 = scmp.le.s32.totalorder 2, %s20
      // Predicated region
      $region61: #{tpu_custom_call.1} parent=5 // pred_check
        %p1477 = pneg %p1476
      $region62: #{tpu_custom_call.1} parent=5 // pred_check_branch
        %1479 = sbr.rel (%p1477) target = $region64
      $region63: #{tpu_custom_call.1} parent=5 // pred_region
        %s1480 = ssub.s32 %s20, 2
        // Predicated region
        $region65: #{tpu_custom_call.1} parent=63 // pred_check
          %p1481 = pneg %p236
        $region66: #{tpu_custom_call.1} parent=63 // pred_check_branch
          %1483 = sbr.rel (%p1481) target = $region68
        $region67: #{tpu_custom_call.1} parent=63 // pred_region
          %s1484 = sand.u32 %s221, 1
          %s1485 = scalar_lea.sflag [#allocation6], %s1484
          %s1486 = sand.u32 %s221, 1
          %s1487 = smul.addr %s1486, 16
          %s1488 = scalar_lea.vmem [#allocation7], %s1487
          %1489 = dma.done %s1485, 256
        $region68: #{tpu_custom_call.1} parent=63 // pred_fallthru
          _
      $region64: #{tpu_custom_call.1} parent=5 // pred_fallthru
        _
    $region6: #{tpu_custom_call.1} parent=1 // loop_footer
      %s24 = sadd.s32 1, %s20
    $region7: #{tpu_custom_call.1} parent=1 // loop_footer_branch
      %19 = sbr.rel target = $region3
    $region8: #{tpu_custom_call.1} parent=1 // loop_exit
      _
    %1490 = vsyncpa [#allocation5], 1
    %s1491 = scalar_lea.sflag [#allocation5], 1
    %1492 = vsyncpa %s1491, 1
    %1493 = vsyncpa [#allocation6], 1
    %s1494 = scalar_lea.sflag [#allocation6], 1
    %1495 = vsyncpa %s1494, 1

</llo_original>
